<compile_context>
chip_gen: v5e
topology: v5e:2x2
jax: 0.10.0
libtpu: 0.0.40
codegen_flags: <defaults>
</compile_context>

<pallas_src>
import functools

import jax
import jax.numpy as jnp
from jax.experimental import pallas as pl
from jax.experimental.pallas import tpu as pltpu

_LANES = 128
_SUBLANES = 8
_ACC_ELEMS = 16 * 1024   # ~16 f32 vregs for the per-chunk depthwise accumulator


def _round_up(x, m):
    return (x + m - 1) // m * m


def _cdiv(a, b):
    return -(-a // b)


def _dwsc_kernel(x_ref, dw_ref, pw_ref, y_ref, stat_ref, *,
                 K, stride, chunk_rows, hout_valid, wout_valid, need_row_mask):
    """One (batch, row-block) grid step of depthwise + pointwise conv.

    x_ref   : (Hp, Wp, Cin_p)          bf16  padded image, resident across h
    dw_ref  : (K*K, Cin_p)             f32   depthwise taps
    pw_ref  : (Cin_p, Cout_p)          bf16  pointwise weights
    y_ref   : (tile_h, Wout_p, Cout_p) bf16  pre-BN activation block
    stat_ref: (2, Cout_p)              f32   [sum(y), sum(y^2)] over the valid
                                             (un-padded) part of this block
    """
    tile_h, wout_p, cout_p = y_ref.shape
    cin_p = x_ref.shape[-1]
    n_chunks = tile_h // chunk_rows

    h_blk = pl.program_id(1)
    row_base = h_blk * tile_h                     # first global output row

    dwv = dw_ref[...]                             # (K*K, Cin_p), tiny

    need_col_mask = wout_valid < wout_p
    if need_col_mask:
        col_valid = jax.lax.broadcasted_iota(
            jnp.int32, (1, wout_p, 1), 1) < wout_valid

    s1 = jnp.zeros((1, cout_p), jnp.float32)
    s2 = jnp.zeros((1, cout_p), jnp.float32)

    for c in range(n_chunks):                     # static unroll, streams to y_ref
        r0 = c * chunk_rows                       # local output row (static)
        acc = jnp.zeros((chunk_rows, wout_p, cin_p), jnp.float32)
        for ky in range(K):
            row_start = (row_base + r0) * stride + ky
            if stride == 1:
                # One aligned full-width band load per ky; kx offsets come from
                # cheap static in-register slices of the band.
                band = x_ref[pl.ds(row_start, chunk_rows), :, :].astype(jnp.float32)
                for kx in range(K):
                    patch = band[:, kx:kx + wout_p, :]
                    tap = dwv[ky * K + kx].reshape(1, 1, cin_p)
                    acc = acc + patch * tap
            else:
                # TODO(synk): decimate rows/cols at the DMA level for stride>1.
                rows = pl.ds(row_start, chunk_rows, stride)
                for kx in range(K):
                    patch = x_ref[rows, pl.ds(kx, wout_p, stride), :].astype(jnp.float32)
                    tap = dwv[ky * K + kx].reshape(1, 1, cin_p)
                    acc = acc + patch * tap

        # Pointwise 1x1 conv: lane-dense bf16 MXU matmul with f32 accumulation.
        m = chunk_rows * wout_p
        y = jnp.dot(acc.reshape(m, cin_p).astype(jnp.bfloat16), pw_ref[...],
                    preferred_element_type=jnp.float32)
        y = y.reshape(chunk_rows, wout_p, cout_p)
        # NOTE: the pointwise bias is intentionally NOT added; training-mode
        # BatchNorm's mean subtraction cancels it exactly.

        # BN partial sums in f32 over valid (un-padded) rows/cols only.
        ym = y
        if need_col_mask:
            ym = jnp.where(col_valid, ym, 0.0)
        if need_row_mask:
            row_ids = jax.lax.broadcasted_iota(
                jnp.int32, (chunk_rows, 1, 1), 0) + (row_base + r0)
            ym = jnp.where(row_ids < hout_valid, ym, 0.0)
        ym2 = ym.reshape(m, cout_p)
        s1 = s1 + jnp.sum(ym2, axis=0, keepdims=True)
        s2 = s2 + jnp.sum(ym2 * ym2, axis=0, keepdims=True)

        y_ref[pl.ds(r0, chunk_rows), :, :] = y.astype(y_ref.dtype)

    stat_ref[...] = jnp.concatenate([s1, s2], axis=0)


def dwsc_forward(x_nchw, dw_w, pw_w, pw_b, gamma, beta, *, stride, eps=1e-5):
    """PyTorch parameter layouts:
    x (N,Cin,H,W), dw_w (Cin,1,K,K), pw_w (Cout,Cin,1,1), pw_b/gamma/beta (Cout,)."""
    del pw_b  # exactly cancelled by training-mode BatchNorm mean subtraction
    N, Cin, H, W = x_nchw.shape
    K = dw_w.shape[-1]
    pad = K // 2
    Hout = (H + 2 * pad - K) // stride + 1
    Wout = (W + 2 * pad - K) // stride + 1
    Cout = pw_w.shape[0]

    Cin_p = _round_up(Cin, _LANES)
    Cout_p = _round_up(Cout, _LANES)
    Wout_p = _round_up(Wout, _SUBLANES)           # layout-free reshapes / dense stores

    # Tile sizing: per-chunk depthwise accumulator <= ~16 f32 vregs (no spills);
    # several chunks per grid step so each output block is HBM-friendly.
    chunk_rows = max(1, min(Hout, _ACC_ELEMS // (Wout_p * Cin_p), 16))
    n_chunks = max(1, min(_cdiv(1024, chunk_rows * Wout_p), _cdiv(Hout, chunk_rows)))
    tile_h = chunk_rows * n_chunks
    Hout_p = _round_up(Hout, tile_h)
    n_hb = Hout_p // tile_h
    assert tile_h % chunk_rows == 0 and Hout_p % tile_h == 0

    Hp = (Hout_p - 1) * stride + K
    Wp = (Wout_p - 1) * stride + K

    # --- boundary layout work (NCHW API): NHWC, bf16, spatial/channel zero-pad ---
    x = jnp.transpose(x_nchw, (0, 2, 3, 1)).astype(jnp.bfloat16)
    xp = jnp.pad(x, ((0, 0),
                     (pad, max(0, Hp - H - pad)),
                     (pad, max(0, Wp - W - pad)),
                     (0, Cin_p - Cin)))[:, :Hp, :Wp, :]

    dw = jnp.transpose(dw_w[:, 0, :, :], (1, 2, 0)).reshape(K * K, Cin)
    dw = jnp.pad(dw.astype(jnp.float32), ((0, 0), (0, Cin_p - Cin)))
    pw = jnp.transpose(pw_w[:, :, 0, 0], (1, 0)).astype(jnp.float32)   # (Cin, Cout)
    pw = jnp.pad(pw, ((0, Cin_p - Cin), (0, Cout_p - Cout))).astype(jnp.bfloat16)

    kernel = functools.partial(
        _dwsc_kernel, K=K, stride=stride, chunk_rows=chunk_rows,
        hout_valid=Hout, wout_valid=Wout, need_row_mask=(Hout_p > Hout))

    y_pad, stats = pl.pallas_call(
        kernel,
        grid=(N, n_hb),
        in_specs=[
            pl.BlockSpec((None, Hp, Wp, Cin_p), lambda n, h: (n, 0, 0, 0)),
            pl.BlockSpec((K * K, Cin_p), lambda n, h: (0, 0)),
            pl.BlockSpec((Cin_p, Cout_p), lambda n, h: (0, 0)),
        ],
        out_specs=(
            pl.BlockSpec((None, tile_h, Wout_p, Cout_p), lambda n, h: (n, h, 0, 0)),
            pl.BlockSpec((None, None, 2, Cout_p), lambda n, h: (n, h, 0, 0)),
        ),
        out_shape=(
            jax.ShapeDtypeStruct((N, Hout_p, Wout_p, Cout_p), jnp.bfloat16),
            jax.ShapeDtypeStruct((N, n_hb, 2, Cout_p), jnp.float32),
        ),
        compiler_params=pltpu.CompilerParams(
            # batch axis shardable across cores; row axis sequential so the
            # resident per-image input block is fetched once per image.
            dimension_semantics=("parallel", "arbitrary"),
            vmem_limit_bytes=48 * 1024 * 1024,   # safe on v7x (64 MiB physical)
        ),
    )(xp, dw, pw)

    # --- tiny cross-block reduction + fold BN affine into scale/shift ---
    total = jnp.sum(stats, axis=(0, 1))                      # (2, Cout_p)
    count = float(N * Hout * Wout)
    mean = total[0, :Cout] / count
    var = jnp.maximum(total[1, :Cout] / count - mean * mean, 0.0)  # clamp cancellation
    inv_std = jax.lax.rsqrt(var + eps)
    scale = gamma.astype(jnp.float32) * inv_std
    shift = beta.astype(jnp.float32) - mean * scale

    # --- fused XLA epilogue: un-pad + per-channel FMA + NCHW transpose ---
    y = y_pad[:, :Hout, :Wout, :Cout].astype(jnp.float32)
    out = y * scale + shift
    return jnp.transpose(out, (0, 3, 1, 2))


def _reference(x, dw_w, pw_w, pw_b, gamma, beta, *, stride, eps=1e-5):
    Cin = x.shape[1]
    K = dw_w.shape[-1]
    pad = K // 2
    dn = ('NCHW', 'OIHW', 'NCHW')
    y = jax.lax.conv_general_dilated(x, dw_w, (stride, stride),
                                     [(pad, pad), (pad, pad)],
                                     feature_group_count=Cin,
                                     dimension_numbers=dn)
    y = jax.lax.conv_general_dilated(y, pw_w, (1, 1), [(0, 0), (0, 0)],
                                     dimension_numbers=dn)
    y = y + pw_b[None, :, None, None]
    mean = jnp.mean(y, axis=(0, 2, 3), keepdims=True)
    var = jnp.mean(jnp.square(y - mean), axis=(0, 2, 3), keepdims=True)
    y = (y - mean) * jax.lax.rsqrt(var + eps)
    return y * gamma[None, :, None, None] + beta[None, :, None, None]


def _run_case(N, Cin, Cout, H, W, K, stride, key):
    k1, k2, k3, k4, k5, k6 = jax.random.split(key, 6)
    x = jax.random.normal(k1, (N, Cin, H, W), jnp.float32)
    dw_w = jax.random.normal(k2, (Cin, 1, K, K), jnp.float32) * 0.3
    pw_w = jax.random.normal(k3, (Cout, Cin, 1, 1), jnp.float32) * 0.3
    pw_b = jax.random.normal(k4, (Cout,), jnp.float32) * 0.1
    gamma = 1.0 + 0.1 * jax.random.normal(k5, (Cout,), jnp.float32)
    beta = 0.1 * jax.random.normal(k6, (Cout,), jnp.float32)

    out = jax.block_until_ready(
        dwsc_forward(x, dw_w, pw_w, pw_b, gamma, beta, stride=stride))
    ref = _reference(x, dw_w, pw_w, pw_b, gamma, beta, stride=stride)

    pad = K // 2
    Hout = (H + 2 * pad - K) // stride + 1
    Wout = (W + 2 * pad - K) // stride + 1
    assert out.shape == (N, Cout, Hout, Wout), out.shape
    # bf16 input / matmul operands / stored activation => ~1% worst-case
    # relative error against the f32 reference.
    err = float(jnp.max(jnp.abs(out - ref)))
    assert jnp.allclose(out, ref, atol=2e-2, rtol=2e-2), err


if __name__ == "__main__":
    # Small, deterministic configurations consistent with DWSC(__init__).
    _run_case(2, 4, 8, 16, 16, 3, 1, jax.random.PRNGKey(0))
    # Exercises the Wout/Hout padding + BN-stat masking path (14 -> 16).
    _run_case(2, 4, 8, 14, 14, 3, 1, jax.random.PRNGKey(1))
    print("KERNEL_OK")
</pallas_src>

<mosaic_0001>
module attributes {stable_mosaic.version = 11 : i64} {
  func.func @_dwsc_kernel(%arg0: i32, %arg1: i32, %arg2: memref<1x18x18x128xbf16, #tpu.memory_space<vmem>>, %arg3: memref<9x128xf32, #tpu.memory_space<vmem>>, %arg4: memref<128x128xbf16, #tpu.memory_space<vmem>>, %arg5: memref<1x16x16x128xbf16, #tpu.memory_space<vmem>>, %arg6: memref<1x1x2x128xf32, #tpu.memory_space<vmem>>) attributes {dimension_semantics = [#tpu.dimension_semantics<parallel>, #tpu.dimension_semantics<arbitrary>], iteration_bounds = array<i64: 2, 1>, scalar_prefetch = 0 : i64, scratch_operands = 0 : i64, tpu.core_type = #tpu.core_type<tc>, window_params = [{transform_indices = @transform_0, window_bounds = array<i64: 1, 18, 18, 128>}, {pipeline_mode = #tpu.pipeline_mode<synchronous>, transform_indices = @transform_1, window_bounds = array<i64: 9, 128>}, {pipeline_mode = #tpu.pipeline_mode<synchronous>, transform_indices = @transform_2, window_bounds = array<i64: 128, 128>}, {transform_indices = @transform_3, window_bounds = array<i64: 1, 16, 16, 128>}, {transform_indices = @transform_4, window_bounds = array<i64: 1, 1, 2, 128>}]} {
    %c16_i32 = arith.constant 16 : i32
    %0 = arith.muli %arg1, %c16_i32 : i32
    %c0 = arith.constant 0 : index
    %c0_0 = arith.constant 0 : index
    %1 = vector.load %arg3[%c0, %c0_0] : memref<9x128xf32, #tpu.memory_space<vmem>>, vector<9x128xf32>
    %cst = arith.constant 0.000000e+00 : f32
    %2 = vector.broadcast %cst : f32 to vector<1x128xf32>
    %cst_1 = arith.constant 0.000000e+00 : f32
    %3 = vector.broadcast %cst_1 : f32 to vector<1x128xf32>
    %cst_2 = arith.constant 0.000000e+00 : f32
    %4 = vector.broadcast %cst_2 : f32 to vector<8x16x128xf32>
    %c0_i32 = arith.constant 0 : i32
    %5 = arith.addi %0, %c0_i32 : i32
    %c1_i32 = arith.constant 1 : i32
    %6 = arith.muli %5, %c1_i32 : i32
    %c0_i32_3 = arith.constant 0 : i32
    %7 = arith.addi %6, %c0_i32_3 : i32
    %c0_4 = arith.constant 0 : index
    %8 = arith.index_cast %7 : i32 to index
    %c0_5 = arith.constant 0 : index
    %c0_6 = arith.constant 0 : index
    %9 = vector.load %arg2[%c0_4, %8, %c0_5, %c0_6] : memref<1x18x18x128xbf16, #tpu.memory_space<vmem>>, vector<1x8x18x128xbf16>
    %10 = vector.shape_cast %9 : vector<1x8x18x128xbf16> to vector<8x18x128xbf16>
    %11 = arith.extf %10 : vector<8x18x128xbf16> to vector<8x18x128xf32>
    %12 = vector.extract_strided_slice %11 {offsets = [0, 0, 0], sizes = [8, 16, 128], strides = [1, 1, 1]} : vector<8x18x128xf32> to vector<8x16x128xf32>
    %13 = vector.extract_strided_slice %1 {offsets = [0, 0], sizes = [1, 128], strides = [1, 1]} : vector<9x128xf32> to vector<1x128xf32>
    %14 = vector.shape_cast %13 : vector<1x128xf32> to vector<128xf32>
    %15 = vector.shape_cast %14 : vector<128xf32> to vector<1x1x128xf32>
    %16 = vector.broadcast %15 : vector<1x1x128xf32> to vector<8x16x128xf32>
    %17 = arith.mulf %12, %16 : vector<8x16x128xf32>
    %18 = arith.addf %4, %17 : vector<8x16x128xf32>
    %19 = vector.extract_strided_slice %11 {offsets = [0, 1, 0], sizes = [8, 16, 128], strides = [1, 1, 1]} : vector<8x18x128xf32> to vector<8x16x128xf32>
    %20 = vector.extract_strided_slice %1 {offsets = [1, 0], sizes = [1, 128], strides = [1, 1]} : vector<9x128xf32> to vector<1x128xf32>
    %21 = vector.shape_cast %20 : vector<1x128xf32> to vector<128xf32>
    %22 = vector.shape_cast %21 : vector<128xf32> to vector<1x1x128xf32>
    %23 = vector.broadcast %22 : vector<1x1x128xf32> to vector<8x16x128xf32>
    %24 = arith.mulf %19, %23 : vector<8x16x128xf32>
    %25 = arith.addf %18, %24 : vector<8x16x128xf32>
    %26 = vector.extract_strided_slice %11 {offsets = [0, 2, 0], sizes = [8, 16, 128], strides = [1, 1, 1]} : vector<8x18x128xf32> to vector<8x16x128xf32>
    %27 = vector.extract_strided_slice %1 {offsets = [2, 0], sizes = [1, 128], strides = [1, 1]} : vector<9x128xf32> to vector<1x128xf32>
    %28 = vector.shape_cast %27 : vector<1x128xf32> to vector<128xf32>
    %29 = vector.shape_cast %28 : vector<128xf32> to vector<1x1x128xf32>
    %30 = vector.broadcast %29 : vector<1x1x128xf32> to vector<8x16x128xf32>
    %31 = arith.mulf %26, %30 : vector<8x16x128xf32>
    %32 = arith.addf %25, %31 : vector<8x16x128xf32>
    %c0_i32_7 = arith.constant 0 : i32
    %33 = arith.addi %0, %c0_i32_7 : i32
    %c1_i32_8 = arith.constant 1 : i32
    %34 = arith.muli %33, %c1_i32_8 : i32
    %c1_i32_9 = arith.constant 1 : i32
    %35 = arith.addi %34, %c1_i32_9 : i32
    %c0_10 = arith.constant 0 : index
    %36 = arith.index_cast %35 : i32 to index
    %c0_11 = arith.constant 0 : index
    %c0_12 = arith.constant 0 : index
    %37 = vector.load %arg2[%c0_10, %36, %c0_11, %c0_12] : memref<1x18x18x128xbf16, #tpu.memory_space<vmem>>, vector<1x8x18x128xbf16>
    %38 = vector.shape_cast %37 : vector<1x8x18x128xbf16> to vector<8x18x128xbf16>
    %39 = arith.extf %38 : vector<8x18x128xbf16> to vector<8x18x128xf32>
    %40 = vector.extract_strided_slice %39 {offsets = [0, 0, 0], sizes = [8, 16, 128], strides = [1, 1, 1]} : vector<8x18x128xf32> to vector<8x16x128xf32>
    %41 = vector.extract_strided_slice %1 {offsets = [3, 0], sizes = [1, 128], strides = [1, 1]} : vector<9x128xf32> to vector<1x128xf32>
    %42 = vector.shape_cast %41 : vector<1x128xf32> to vector<128xf32>
    %43 = vector.shape_cast %42 : vector<128xf32> to vector<1x1x128xf32>
    %44 = vector.broadcast %43 : vector<1x1x128xf32> to vector<8x16x128xf32>
    %45 = arith.mulf %40, %44 : vector<8x16x128xf32>
    %46 = arith.addf %32, %45 : vector<8x16x128xf32>
    %47 = vector.extract_strided_slice %39 {offsets = [0, 1, 0], sizes = [8, 16, 128], strides = [1, 1, 1]} : vector<8x18x128xf32> to vector<8x16x128xf32>
    %48 = vector.extract_strided_slice %1 {offsets = [4, 0], sizes = [1, 128], strides = [1, 1]} : vector<9x128xf32> to vector<1x128xf32>
    %49 = vector.shape_cast %48 : vector<1x128xf32> to vector<128xf32>
    %50 = vector.shape_cast %49 : vector<128xf32> to vector<1x1x128xf32>
    %51 = vector.broadcast %50 : vector<1x1x128xf32> to vector<8x16x128xf32>
    %52 = arith.mulf %47, %51 : vector<8x16x128xf32>
    %53 = arith.addf %46, %52 : vector<8x16x128xf32>
    %54 = vector.extract_strided_slice %39 {offsets = [0, 2, 0], sizes = [8, 16, 128], strides = [1, 1, 1]} : vector<8x18x128xf32> to vector<8x16x128xf32>
    %55 = vector.extract_strided_slice %1 {offsets = [5, 0], sizes = [1, 128], strides = [1, 1]} : vector<9x128xf32> to vector<1x128xf32>
    %56 = vector.shape_cast %55 : vector<1x128xf32> to vector<128xf32>
    %57 = vector.shape_cast %56 : vector<128xf32> to vector<1x1x128xf32>
    %58 = vector.broadcast %57 : vector<1x1x128xf32> to vector<8x16x128xf32>
    %59 = arith.mulf %54, %58 : vector<8x16x128xf32>
    %60 = arith.addf %53, %59 : vector<8x16x128xf32>
    %c0_i32_13 = arith.constant 0 : i32
    %61 = arith.addi %0, %c0_i32_13 : i32
    %c1_i32_14 = arith.constant 1 : i32
    %62 = arith.muli %61, %c1_i32_14 : i32
    %c2_i32 = arith.constant 2 : i32
    %63 = arith.addi %62, %c2_i32 : i32
    %c0_15 = arith.constant 0 : index
    %64 = arith.index_cast %63 : i32 to index
    %c0_16 = arith.constant 0 : index
    %c0_17 = arith.constant 0 : index
    %65 = vector.load %arg2[%c0_15, %64, %c0_16, %c0_17] : memref<1x18x18x128xbf16, #tpu.memory_space<vmem>>, vector<1x8x18x128xbf16>
    %66 = vector.shape_cast %65 : vector<1x8x18x128xbf16> to vector<8x18x128xbf16>
    %67 = arith.extf %66 : vector<8x18x128xbf16> to vector<8x18x128xf32>
    %68 = vector.extract_strided_slice %67 {offsets = [0, 0, 0], sizes = [8, 16, 128], strides = [1, 1, 1]} : vector<8x18x128xf32> to vector<8x16x128xf32>
    %69 = vector.extract_strided_slice %1 {offsets = [6, 0], sizes = [1, 128], strides = [1, 1]} : vector<9x128xf32> to vector<1x128xf32>
    %70 = vector.shape_cast %69 : vector<1x128xf32> to vector<128xf32>
    %71 = vector.shape_cast %70 : vector<128xf32> to vector<1x1x128xf32>
    %72 = vector.broadcast %71 : vector<1x1x128xf32> to vector<8x16x128xf32>
    %73 = arith.mulf %68, %72 : vector<8x16x128xf32>
    %74 = arith.addf %60, %73 : vector<8x16x128xf32>
    %75 = vector.extract_strided_slice %67 {offsets = [0, 1, 0], sizes = [8, 16, 128], strides = [1, 1, 1]} : vector<8x18x128xf32> to vector<8x16x128xf32>
    %76 = vector.extract_strided_slice %1 {offsets = [7, 0], sizes = [1, 128], strides = [1, 1]} : vector<9x128xf32> to vector<1x128xf32>
    %77 = vector.shape_cast %76 : vector<1x128xf32> to vector<128xf32>
    %78 = vector.shape_cast %77 : vector<128xf32> to vector<1x1x128xf32>
    %79 = vector.broadcast %78 : vector<1x1x128xf32> to vector<8x16x128xf32>
    %80 = arith.mulf %75, %79 : vector<8x16x128xf32>
    %81 = arith.addf %74, %80 : vector<8x16x128xf32>
    %82 = vector.extract_strided_slice %67 {offsets = [0, 2, 0], sizes = [8, 16, 128], strides = [1, 1, 1]} : vector<8x18x128xf32> to vector<8x16x128xf32>
    %83 = vector.extract_strided_slice %1 {offsets = [8, 0], sizes = [1, 128], strides = [1, 1]} : vector<9x128xf32> to vector<1x128xf32>
    %84 = vector.shape_cast %83 : vector<1x128xf32> to vector<128xf32>
    %85 = vector.shape_cast %84 : vector<128xf32> to vector<1x1x128xf32>
    %86 = vector.broadcast %85 : vector<1x1x128xf32> to vector<8x16x128xf32>
    %87 = arith.mulf %82, %86 : vector<8x16x128xf32>
    %88 = arith.addf %81, %87 : vector<8x16x128xf32>
    %89 = vector.shape_cast %88 : vector<8x16x128xf32> to vector<128x128xf32>
    %90 = arith.truncf %89 : vector<128x128xf32> to vector<128x128xbf16>
    %c0_18 = arith.constant 0 : index
    %c0_19 = arith.constant 0 : index
    %91 = vector.load %arg4[%c0_18, %c0_19] : memref<128x128xbf16, #tpu.memory_space<vmem>>, vector<128x128xbf16>
    %cst_20 = arith.constant dense<0.000000e+00> : vector<128x128xf32>
    %92 = tpu.matmul %90, %91, %cst_20 {dimension_numbers = #tpu.dot_dimension_numbers<[1], [0], [0], [1], [0, 0, 1, 1], [], []>} : vector<128x128xbf16>, vector<128x128xbf16>, vector<128x128xf32> -> vector<128x128xf32>
    %93 = vector.shape_cast %92 : vector<128x128xf32> to vector<8x16x128xf32>
    %94 = vector.shape_cast %93 : vector<8x16x128xf32> to vector<128x128xf32>
    %cst_21 = arith.constant dense<0.000000e+00> : vector<128xf32>
    %95 = vector.multi_reduction <add>, %94, %cst_21 [0] : vector<128x128xf32> to vector<128xf32>
    %96 = vector.shape_cast %95 : vector<128xf32> to vector<1x128xf32>
    %97 = arith.addf %2, %96 : vector<1x128xf32>
    %98 = arith.mulf %94, %94 : vector<128x128xf32>
    %cst_22 = arith.constant dense<0.000000e+00> : vector<128xf32>
    %99 = vector.multi_reduction <add>, %98, %cst_22 [0] : vector<128x128xf32> to vector<128xf32>
    %100 = vector.shape_cast %99 : vector<128xf32> to vector<1x128xf32>
    %101 = arith.addf %3, %100 : vector<1x128xf32>
    %102 = arith.truncf %93 : vector<8x16x128xf32> to vector<8x16x128xbf16>
    %c0_23 = arith.constant 0 : index
    %c0_24 = arith.constant 0 : index
    %c0_25 = arith.constant 0 : index
    %c0_26 = arith.constant 0 : index
    %103 = vector.load %arg5[%c0_23, %c0_24, %c0_25, %c0_26] : memref<1x16x16x128xbf16, #tpu.memory_space<vmem>>, vector<1x8x16x128xbf16>
    %104 = vector.shape_cast %103 : vector<1x8x16x128xbf16> to vector<8x16x128xbf16>
    %105 = vector.shape_cast %102 : vector<8x16x128xbf16> to vector<1x8x16x128xbf16>
    tpu.vector_store %arg5[%c0_23, %c0_24, %c0_25, %c0_26], %105 {strides = array<i32>} : memref<1x16x16x128xbf16, #tpu.memory_space<vmem>>, vector<1x8x16x128xbf16>,
    %cst_27 = arith.constant 0.000000e+00 : f32
    %106 = vector.broadcast %cst_27 : f32 to vector<8x16x128xf32>
    %c8_i32 = arith.constant 8 : i32
    %107 = arith.addi %0, %c8_i32 : i32
    %c1_i32_28 = arith.constant 1 : i32
    %108 = arith.muli %107, %c1_i32_28 : i32
    %c0_i32_29 = arith.constant 0 : i32
    %109 = arith.addi %108, %c0_i32_29 : i32
    %c0_30 = arith.constant 0 : index
    %110 = arith.index_cast %109 : i32 to index
    %c0_31 = arith.constant 0 : index
    %c0_32 = arith.constant 0 : index
    %111 = vector.load %arg2[%c0_30, %110, %c0_31, %c0_32] : memref<1x18x18x128xbf16, #tpu.memory_space<vmem>>, vector<1x8x18x128xbf16>
    %112 = vector.shape_cast %111 : vector<1x8x18x128xbf16> to vector<8x18x128xbf16>
    %113 = arith.extf %112 : vector<8x18x128xbf16> to vector<8x18x128xf32>
    %114 = vector.extract_strided_slice %113 {offsets = [0, 0, 0], sizes = [8, 16, 128], strides = [1, 1, 1]} : vector<8x18x128xf32> to vector<8x16x128xf32>
    %115 = vector.extract_strided_slice %1 {offsets = [0, 0], sizes = [1, 128], strides = [1, 1]} : vector<9x128xf32> to vector<1x128xf32>
    %116 = vector.shape_cast %115 : vector<1x128xf32> to vector<128xf32>
    %117 = vector.shape_cast %116 : vector<128xf32> to vector<1x1x128xf32>
    %118 = vector.broadcast %117 : vector<1x1x128xf32> to vector<8x16x128xf32>
    %119 = arith.mulf %114, %118 : vector<8x16x128xf32>
    %120 = arith.addf %106, %119 : vector<8x16x128xf32>
    %121 = vector.extract_strided_slice %113 {offsets = [0, 1, 0], sizes = [8, 16, 128], strides = [1, 1, 1]} : vector<8x18x128xf32> to vector<8x16x128xf32>
    %122 = vector.extract_strided_slice %1 {offsets = [1, 0], sizes = [1, 128], strides = [1, 1]} : vector<9x128xf32> to vector<1x128xf32>
    %123 = vector.shape_cast %122 : vector<1x128xf32> to vector<128xf32>
    %124 = vector.shape_cast %123 : vector<128xf32> to vector<1x1x128xf32>
    %125 = vector.broadcast %124 : vector<1x1x128xf32> to vector<8x16x128xf32>
    %126 = arith.mulf %121, %125 : vector<8x16x128xf32>
    %127 = arith.addf %120, %126 : vector<8x16x128xf32>
    %128 = vector.extract_strided_slice %113 {offsets = [0, 2, 0], sizes = [8, 16, 128], strides = [1, 1, 1]} : vector<8x18x128xf32> to vector<8x16x128xf32>
    %129 = vector.extract_strided_slice %1 {offsets = [2, 0], sizes = [1, 128], strides = [1, 1]} : vector<9x128xf32> to vector<1x128xf32>
    %130 = vector.shape_cast %129 : vector<1x128xf32> to vector<128xf32>
    %131 = vector.shape_cast %130 : vector<128xf32> to vector<1x1x128xf32>
    %132 = vector.broadcast %131 : vector<1x1x128xf32> to vector<8x16x128xf32>
    %133 = arith.mulf %128, %132 : vector<8x16x128xf32>
    %134 = arith.addf %127, %133 : vector<8x16x128xf32>
    %c8_i32_33 = arith.constant 8 : i32
    %135 = arith.addi %0, %c8_i32_33 : i32
    %c1_i32_34 = arith.constant 1 : i32
    %136 = arith.muli %135, %c1_i32_34 : i32
    %c1_i32_35 = arith.constant 1 : i32
    %137 = arith.addi %136, %c1_i32_35 : i32
    %c0_36 = arith.constant 0 : index
    %138 = arith.index_cast %137 : i32 to index
    %c0_37 = arith.constant 0 : index
    %c0_38 = arith.constant 0 : index
    %139 = vector.load %arg2[%c0_36, %138, %c0_37, %c0_38] : memref<1x18x18x128xbf16, #tpu.memory_space<vmem>>, vector<1x8x18x128xbf16>
    %140 = vector.shape_cast %139 : vector<1x8x18x128xbf16> to vector<8x18x128xbf16>
    %141 = arith.extf %140 : vector<8x18x128xbf16> to vector<8x18x128xf32>
    %142 = vector.extract_strided_slice %141 {offsets = [0, 0, 0], sizes = [8, 16, 128], strides = [1, 1, 1]} : vector<8x18x128xf32> to vector<8x16x128xf32>
    %143 = vector.extract_strided_slice %1 {offsets = [3, 0], sizes = [1, 128], strides = [1, 1]} : vector<9x128xf32> to vector<1x128xf32>
    %144 = vector.shape_cast %143 : vector<1x128xf32> to vector<128xf32>
    %145 = vector.shape_cast %144 : vector<128xf32> to vector<1x1x128xf32>
    %146 = vector.broadcast %145 : vector<1x1x128xf32> to vector<8x16x128xf32>
    %147 = arith.mulf %142, %146 : vector<8x16x128xf32>
    %148 = arith.addf %134, %147 : vector<8x16x128xf32>
    %149 = vector.extract_strided_slice %141 {offsets = [0, 1, 0], sizes = [8, 16, 128], strides = [1, 1, 1]} : vector<8x18x128xf32> to vector<8x16x128xf32>
    %150 = vector.extract_strided_slice %1 {offsets = [4, 0], sizes = [1, 128], strides = [1, 1]} : vector<9x128xf32> to vector<1x128xf32>
    %151 = vector.shape_cast %150 : vector<1x128xf32> to vector<128xf32>
    %152 = vector.shape_cast %151 : vector<128xf32> to vector<1x1x128xf32>
    %153 = vector.broadcast %152 : vector<1x1x128xf32> to vector<8x16x128xf32>
    %154 = arith.mulf %149, %153 : vector<8x16x128xf32>
    %155 = arith.addf %148, %154 : vector<8x16x128xf32>
    %156 = vector.extract_strided_slice %141 {offsets = [0, 2, 0], sizes = [8, 16, 128], strides = [1, 1, 1]} : vector<8x18x128xf32> to vector<8x16x128xf32>
    %157 = vector.extract_strided_slice %1 {offsets = [5, 0], sizes = [1, 128], strides = [1, 1]} : vector<9x128xf32> to vector<1x128xf32>
    %158 = vector.shape_cast %157 : vector<1x128xf32> to vector<128xf32>
    %159 = vector.shape_cast %158 : vector<128xf32> to vector<1x1x128xf32>
    %160 = vector.broadcast %159 : vector<1x1x128xf32> to vector<8x16x128xf32>
    %161 = arith.mulf %156, %160 : vector<8x16x128xf32>
    %162 = arith.addf %155, %161 : vector<8x16x128xf32>
    %c8_i32_39 = arith.constant 8 : i32
    %163 = arith.addi %0, %c8_i32_39 : i32
    %c1_i32_40 = arith.constant 1 : i32
    %164 = arith.muli %163, %c1_i32_40 : i32
    %c2_i32_41 = arith.constant 2 : i32
    %165 = arith.addi %164, %c2_i32_41 : i32
    %c0_42 = arith.constant 0 : index
    %166 = arith.index_cast %165 : i32 to index
    %c0_43 = arith.constant 0 : index
    %c0_44 = arith.constant 0 : index
    %167 = vector.load %arg2[%c0_42, %166, %c0_43, %c0_44] : memref<1x18x18x128xbf16, #tpu.memory_space<vmem>>, vector<1x8x18x128xbf16>
    %168 = vector.shape_cast %167 : vector<1x8x18x128xbf16> to vector<8x18x128xbf16>
    %169 = arith.extf %168 : vector<8x18x128xbf16> to vector<8x18x128xf32>
    %170 = vector.extract_strided_slice %169 {offsets = [0, 0, 0], sizes = [8, 16, 128], strides = [1, 1, 1]} : vector<8x18x128xf32> to vector<8x16x128xf32>
    %171 = vector.extract_strided_slice %1 {offsets = [6, 0], sizes = [1, 128], strides = [1, 1]} : vector<9x128xf32> to vector<1x128xf32>
    %172 = vector.shape_cast %171 : vector<1x128xf32> to vector<128xf32>
    %173 = vector.shape_cast %172 : vector<128xf32> to vector<1x1x128xf32>
    %174 = vector.broadcast %173 : vector<1x1x128xf32> to vector<8x16x128xf32>
    %175 = arith.mulf %170, %174 : vector<8x16x128xf32>
    %176 = arith.addf %162, %175 : vector<8x16x128xf32>
    %177 = vector.extract_strided_slice %169 {offsets = [0, 1, 0], sizes = [8, 16, 128], strides = [1, 1, 1]} : vector<8x18x128xf32> to vector<8x16x128xf32>
    %178 = vector.extract_strided_slice %1 {offsets = [7, 0], sizes = [1, 128], strides = [1, 1]} : vector<9x128xf32> to vector<1x128xf32>
    %179 = vector.shape_cast %178 : vector<1x128xf32> to vector<128xf32>
    %180 = vector.shape_cast %179 : vector<128xf32> to vector<1x1x128xf32>
    %181 = vector.broadcast %180 : vector<1x1x128xf32> to vector<8x16x128xf32>
    %182 = arith.mulf %177, %181 : vector<8x16x128xf32>
    %183 = arith.addf %176, %182 : vector<8x16x128xf32>
    %184 = vector.extract_strided_slice %169 {offsets = [0, 2, 0], sizes = [8, 16, 128], strides = [1, 1, 1]} : vector<8x18x128xf32> to vector<8x16x128xf32>
    %185 = vector.extract_strided_slice %1 {offsets = [8, 0], sizes = [1, 128], strides = [1, 1]} : vector<9x128xf32> to vector<1x128xf32>
    %186 = vector.shape_cast %185 : vector<1x128xf32> to vector<128xf32>
    %187 = vector.shape_cast %186 : vector<128xf32> to vector<1x1x128xf32>
    %188 = vector.broadcast %187 : vector<1x1x128xf32> to vector<8x16x128xf32>
    %189 = arith.mulf %184, %188 : vector<8x16x128xf32>
    %190 = arith.addf %183, %189 : vector<8x16x128xf32>
    %191 = vector.shape_cast %190 : vector<8x16x128xf32> to vector<128x128xf32>
    %192 = arith.truncf %191 : vector<128x128xf32> to vector<128x128xbf16>
    %c0_45 = arith.constant 0 : index
    %c0_46 = arith.constant 0 : index
    %193 = vector.load %arg4[%c0_45, %c0_46] : memref<128x128xbf16, #tpu.memory_space<vmem>>, vector<128x128xbf16>
    %cst_47 = arith.constant dense<0.000000e+00> : vector<128x128xf32>
    %194 = tpu.matmul %192, %193, %cst_47 {dimension_numbers = #tpu.dot_dimension_numbers<[1], [0], [0], [1], [0, 0, 1, 1], [], []>} : vector<128x128xbf16>, vector<128x128xbf16>, vector<128x128xf32> -> vector<128x128xf32>
    %195 = vector.shape_cast %194 : vector<128x128xf32> to vector<8x16x128xf32>
    %196 = vector.shape_cast %195 : vector<8x16x128xf32> to vector<128x128xf32>
    %cst_48 = arith.constant dense<0.000000e+00> : vector<128xf32>
    %197 = vector.multi_reduction <add>, %196, %cst_48 [0] : vector<128x128xf32> to vector<128xf32>
    %198 = vector.shape_cast %197 : vector<128xf32> to vector<1x128xf32>
    %199 = arith.addf %97, %198 : vector<1x128xf32>
    %200 = arith.mulf %196, %196 : vector<128x128xf32>
    %cst_49 = arith.constant dense<0.000000e+00> : vector<128xf32>
    %201 = vector.multi_reduction <add>, %200, %cst_49 [0] : vector<128x128xf32> to vector<128xf32>
    %202 = vector.shape_cast %201 : vector<128xf32> to vector<1x128xf32>
    %203 = arith.addf %101, %202 : vector<1x128xf32>
    %204 = arith.truncf %195 : vector<8x16x128xf32> to vector<8x16x128xbf16>
    %c0_50 = arith.constant 0 : index
    %c8 = arith.constant 8 : index
    %c0_51 = arith.constant 0 : index
    %c0_52 = arith.constant 0 : index
    %205 = vector.load %arg5[%c0_50, %c8, %c0_51, %c0_52] : memref<1x16x16x128xbf16, #tpu.memory_space<vmem>>, vector<1x8x16x128xbf16>
    %206 = vector.shape_cast %205 : vector<1x8x16x128xbf16> to vector<8x16x128xbf16>
    %207 = vector.shape_cast %204 : vector<8x16x128xbf16> to vector<1x8x16x128xbf16>
    tpu.vector_store %arg5[%c0_50, %c8, %c0_51, %c0_52], %207 {strides = array<i32>} : memref<1x16x16x128xbf16, #tpu.memory_space<vmem>>, vector<1x8x16x128xbf16>,
    %208 = tpu.concatenate %199, %203 in 0 : vector<1x128xf32>, vector<1x128xf32> -> vector<2x128xf32>
    %c0_53 = arith.constant 0 : index
    %c0_54 = arith.constant 0 : index
    %c0_55 = arith.constant 0 : index
    %c0_56 = arith.constant 0 : index
    %209 = vector.load %arg6[%c0_53, %c0_54, %c0_55, %c0_56] : memref<1x1x2x128xf32, #tpu.memory_space<vmem>>, vector<1x1x2x128xf32>
    %210 = vector.shape_cast %209 : vector<1x1x2x128xf32> to vector<2x128xf32>
    %211 = vector.shape_cast %208 : vector<2x128xf32> to vector<1x1x2x128xf32>
    tpu.vector_store %arg6[%c0_53, %c0_54, %c0_55, %c0_56], %211 {strides = array<i32>} : memref<1x1x2x128xf32, #tpu.memory_space<vmem>>, vector<1x1x2x128xf32>,
    return
  }
  func.func @transform_0(%arg0: i32, %arg1: i32) -> (i32, i32, i32, i32) {
    %c0_i32 = arith.constant 0 : i32
    %c0_i32_0 = arith.constant 0 : i32
    %c0_i32_1 = arith.constant 0 : i32
    %c0_i32_2 = arith.constant 0 : i32
    return %arg0, %c0_i32, %c0_i32_0, %c0_i32_1 : i32, i32, i32, i32
  }
  func.func @transform_1(%arg0: i32, %arg1: i32) -> (i32, i32) {
    %c0_i32 = arith.constant 0 : i32
    %c0_i32_0 = arith.constant 0 : i32
    %c0_i32_1 = arith.constant 0 : i32
    return %c0_i32, %c0_i32_0 : i32, i32
  }
  func.func @transform_2(%arg0: i32, %arg1: i32) -> (i32, i32) {
    %c0_i32 = arith.constant 0 : i32
    %c0_i32_0 = arith.constant 0 : i32
    %c0_i32_1 = arith.constant 0 : i32
    return %c0_i32, %c0_i32_0 : i32, i32
  }
  func.func @transform_3(%arg0: i32, %arg1: i32) -> (i32, i32, i32, i32) {
    %c0_i32 = arith.constant 0 : i32
    %c0_i32_0 = arith.constant 0 : i32
    %c0_i32_1 = arith.constant 0 : i32
    return %arg0, %arg1, %c0_i32, %c0_i32_0 : i32, i32, i32, i32
  }
  func.func @transform_4(%arg0: i32, %arg1: i32) -> (i32, i32, i32, i32) {
    %c0_i32 = arith.constant 0 : i32
    %c0_i32_0 = arith.constant 0 : i32
    %c0_i32_1 = arith.constant 0 : i32
    return %arg0, %arg1, %c0_i32, %c0_i32_0 : i32, i32, i32, i32
  }
}

</mosaic_0001>

<llo_original>
// kernel: tpu_custom_call.1
$region0: #{tpu_custom_call.1}
  #allocation0 [shape = 'u32[]', space=smem, size = 0x4, offset = 0x4, fixed_abs, tag = 'smem constant byte address 0x4 - core index']
  #allocation1 [shape = 'u32[72,128]{1,0:T(1,128)}', space=vmem, size = 0x9000, scoped, tag = 'internal scratch']
  %s0 = inlined_call_operand.vmem [shape: bf16[2,18,18,128], index: 0, kind: input, shape index: {}]
  %s1 = inlined_call_operand.vmem [shape: f32[9,128], index: 1, kind: input, shape index: {}]
  %s2 = inlined_call_operand.vmem [shape: bf16[128,128], index: 2, kind: input, shape index: {}]
  %s3 = inlined_call_operand.hbm [shape: bf16[2,16,16,128], index: 3, kind: output, shape index: {0}]
  %s4 = inlined_call_operand.hbm [shape: f32[2,1,2,128], index: 4, kind: output, shape index: {1}]
  %5 = xla_tuple %s3, %s4
  %s6 = sld [smem:[#allocation0]]
  $region53: #{tpu_custom_call.1} parent=0
    _
  %s8 = ssub.s32 1, %s6
  %s9 = scalar_select 0, %s8, %s6
  $region1: #{tpu_custom_call.1} parent=0
    #allocation2 [shape = 'u8[131072]{0}', space=vmem, size = 0x20000, scoped, tag = 'output window, operand 0']
    #allocation3 [shape = 's32[2]{0}', space=sflag, size = 0x8, scoped, tag = 'scoped memory for tpu_custom_call.1']
    #allocation4 [shape = 'u8[2048]{0}', space=vmem, size = 0x800, scoped, tag = 'output window, operand 1']
    #allocation5 [shape = 's32[2]{0}', space=sflag, size = 0x8, scoped, tag = 'scoped memory for tpu_custom_call.1']
    %10 = vsyncpa [#allocation3], 0
    %s11 = scalar_lea.sflag [#allocation3], 1
    %12 = vsyncpa %s11, 0
    %13 = vsyncpa [#allocation5], 0
    %s14 = scalar_lea.sflag [#allocation5], 1
    %15 = vsyncpa %s14, 0
    loop: start=0, step=1, limit=4
    $region2: #{tpu_custom_call.1} parent=1 // loop_pre_header
      _
    $region3: #{tpu_custom_call.1} parent=1 // loop_header
      %s17 = sphi 0, %s21
      %p18 = scmp.ge.s32.totalorder %s17, 4
      %s24 = sphi 0, %s36
      %s25 = sphi 0, %s32
      %s26 = sphi 0, %s24
      %s27 = sphi 0, %s25
      %s28 = sphi 0, %s26
      %s29 = sphi 0, %s27
      %s39 = sphi 0, %s41
      %s42 = sphi 0, %s39
      %s43 = sphi 0, %s42
      %s59 = sphi 0, %s43
      %s63 = sphi 0, %s63
      %s65 = sphi 0, %s63
      %s66 = sphi 0, %s65
      %s80 = sphi 0, %s66
      %s84 = sphi 0, %s84
      %s86 = sphi 0, %s84
      %s87 = sphi 0, %s86
      %s101 = sphi 0, %s87
      %s109 = sphi 0, %s111
      %s112 = sphi 0, %s109
      %s113 = sphi 0, %s112
      %s129 = sphi 0, %s113
      %s137 = sphi 0, %s139
      %s140 = sphi 0, %s137
      %s141 = sphi 0, %s140
      %s157 = sphi 0, %s141
    $region4: #{tpu_custom_call.1} parent=1 // loop_header_branch
      %20 = sbr.rel (%p18) target = $region8
    $region5: #{tpu_custom_call.1} parent=1 // loop_body
      %s22 = ssub.s32 %s17, 1
      %s23 = ssub.s32 %s17, 2
      %s30 = sadd.s32 1, %s25
      %p31 = scmp.ge.s32.totalorder %s30, 1
      %s32 = scalar_select %p31, 0, %s30
      %s33 = sadd.s32 1, %s24
      %s34 = scalar_select %p31, %s33, %s24
      %p35 = scmp.ge.s32.totalorder %s34, 2
      %s36 = scalar_select %p35, 0, %s34
      %s37 = ssub.s32 %s24, %s36
      %p38 = scmp.eq.s32.totalorder %s37, 0
      %s40 = sadd.s32 %s39, 1
      %s41 = scalar_select %p38, %s39, %s40
      %p44 = pneg %p38
      %p45 = scmp.eq.s32.totalorder %s17, 1
      %p46 = por %p44, %p45
      %p47 = scmp.ne.s32.totalorder %s39, %s42
      %p48 = scmp.eq.s32.totalorder %s17, 0
      %p49 = por %p47, %p48
      %p50 = scmp.ne.s32.totalorder %s39, %s42
      %p51 = scmp.eq.s32.totalorder %s22, 1
      %p52 = por %p50, %p51
      %p53 = scmp.ne.s32.totalorder %s42, %s43
      %p54 = scmp.eq.s32.totalorder %s22, 0
      %p55 = por %p53, %p54
      %p56 = scmp.ne.s32.totalorder %s42, %s43
      %p57 = scmp.eq.s32.totalorder %s23, 1
      %p58 = por %p56, %p57
      %p60 = scmp.ne.s32.totalorder %s43, %s59
      %p61 = scmp.eq.s32.totalorder %s23, 0
      %p62 = por %p60, %p61
      %s64 = sadd.s32 %s63, 1
      %p67 = scmp.eq.s32.totalorder %s17, 1
      %p68 = scmp.ne.s32.totalorder %s63, %s65
      %p69 = scmp.eq.s32.totalorder %s17, 0
      %p70 = por %p68, %p69
      %p71 = scmp.ne.s32.totalorder %s63, %s65
      %p72 = scmp.eq.s32.totalorder %s22, 1
      %p73 = por %p71, %p72
      %p74 = scmp.ne.s32.totalorder %s65, %s66
      %p75 = scmp.eq.s32.totalorder %s22, 0
      %p76 = por %p74, %p75
      %p77 = scmp.ne.s32.totalorder %s65, %s66
      %p78 = scmp.eq.s32.totalorder %s23, 1
      %p79 = por %p77, %p78
      %p81 = scmp.ne.s32.totalorder %s66, %s80
      %p82 = scmp.eq.s32.totalorder %s23, 0
      %p83 = por %p81, %p82
      %s85 = sadd.s32 %s84, 1
      %p88 = scmp.eq.s32.totalorder %s17, 1
      %p89 = scmp.ne.s32.totalorder %s84, %s86
      %p90 = scmp.eq.s32.totalorder %s17, 0
      %p91 = por %p89, %p90
      %p92 = scmp.ne.s32.totalorder %s84, %s86
      %p93 = scmp.eq.s32.totalorder %s22, 1
      %p94 = por %p92, %p93
      %p95 = scmp.ne.s32.totalorder %s86, %s87
      %p96 = scmp.eq.s32.totalorder %s22, 0
      %p97 = por %p95, %p96
      %p98 = scmp.ne.s32.totalorder %s86, %s87
      %p99 = scmp.eq.s32.totalorder %s23, 1
      %p100 = por %p98, %p99
      %p102 = scmp.ne.s32.totalorder %s87, %s101
      %p103 = scmp.eq.s32.totalorder %s23, 0
      %p104 = por %p102, %p103
      %s105 = ssub.s32 %s24, %s36
      %s106 = ssub.s32 %s25, %s32
      %s107 = sor.u32 %s105, %s106
      %p108 = scmp.eq.s32.totalorder %s107, 0
      %s110 = sadd.s32 %s109, 1
      %s111 = scalar_select %p108, %s109, %s110
      %p114 = pneg %p108
      %p115 = scmp.eq.s32.totalorder %s17, 1
      %p116 = por %p114, %p115
      %p117 = scmp.ne.s32.totalorder %s109, %s112
      %p118 = scmp.eq.s32.totalorder %s17, 0
      %p119 = por %p117, %p118
      %p120 = scmp.ne.s32.totalorder %s109, %s112
      %p121 = scmp.eq.s32.totalorder %s22, 1
      %p122 = por %p120, %p121
      %p123 = scmp.ne.s32.totalorder %s112, %s113
      %p124 = scmp.eq.s32.totalorder %s22, 0
      %p125 = por %p123, %p124
      %p126 = scmp.ne.s32.totalorder %s112, %s113
      %p127 = scmp.eq.s32.totalorder %s23, 1
      %p128 = por %p126, %p127
      %p130 = scmp.ne.s32.totalorder %s113, %s129
      %p131 = scmp.eq.s32.totalorder %s23, 0
      %p132 = por %p130, %p131
      %s133 = ssub.s32 %s24, %s36
      %s134 = ssub.s32 %s25, %s32
      %s135 = sor.u32 %s133, %s134
      %p136 = scmp.eq.s32.totalorder %s135, 0
      %s138 = sadd.s32 %s137, 1
      %s139 = scalar_select %p136, %s137, %s138
      %p142 = pneg %p136
      %p143 = scmp.eq.s32.totalorder %s17, 1
      %p144 = por %p142, %p143
      %p145 = scmp.ne.s32.totalorder %s137, %s140
      %p146 = scmp.eq.s32.totalorder %s17, 0
      %p147 = por %p145, %p146
      %p148 = scmp.ne.s32.totalorder %s137, %s140
      %p149 = scmp.eq.s32.totalorder %s22, 1
      %p150 = por %p148, %p149
      %p151 = scmp.ne.s32.totalorder %s140, %s141
      %p152 = scmp.eq.s32.totalorder %s22, 0
      %p153 = por %p151, %p152
      %p154 = scmp.ne.s32.totalorder %s140, %s141
      %p155 = scmp.eq.s32.totalorder %s23, 1
      %p156 = por %p154, %p155
      %p158 = scmp.ne.s32.totalorder %s141, %s157
      %p159 = scmp.eq.s32.totalorder %s23, 0
      %p160 = por %p158, %p159
      %p161 = scmp.le.s32.totalorder 1, %s17
      %p162 = scmp.lt.s32.totalorder %s17, 3
      %p163 = pnand %p161, %p162
      %p164 = pneg %p163
      // Predicated region
      $region9: #{tpu_custom_call.1} parent=5 // pred_check
        _
      $region10: #{tpu_custom_call.1} parent=5 // pred_check_branch
        %166 = sbr.rel (%p163) target = $region12
      $region11: #{tpu_custom_call.1} parent=5 // pred_region
        %s167 = ssub.s32 %s17, 1
        // Predicated region
        $region13: #{tpu_custom_call.1} parent=11 // pred_check
          %p168 = pneg %p76
        $region14: #{tpu_custom_call.1} parent=11 // pred_check_branch
          %170 = sbr.rel (%p168) target = $region16
        $region15: #{tpu_custom_call.1} parent=11 // pred_region
          _
        $region16: #{tpu_custom_call.1} parent=11 // pred_fallthru
          _
        // Predicated region
        $region17: #{tpu_custom_call.1} parent=11 // pred_check
          %p171 = pneg %p97
        $region18: #{tpu_custom_call.1} parent=11 // pred_check_branch
          %173 = sbr.rel (%p171) target = $region20
        $region19: #{tpu_custom_call.1} parent=11 // pred_region
          _
        $region20: #{tpu_custom_call.1} parent=11 // pred_fallthru
          _
      $region12: #{tpu_custom_call.1} parent=5 // pred_fallthru
        _
      %p174 = scmp.lt.s32.totalorder %s17, 2
      // Predicated region
      $region21: #{tpu_custom_call.1} parent=5 // pred_check
        %p175 = pneg %p174
      $region22: #{tpu_custom_call.1} parent=5 // pred_check_branch
        %177 = sbr.rel (%p175) target = $region24
      $region23: #{tpu_custom_call.1} parent=5 // pred_region
        // Predicated region
        $region25: #{tpu_custom_call.1} parent=23 // pred_check
          %p178 = pneg %p49
        $region26: #{tpu_custom_call.1} parent=23 // pred_check_branch
          %180 = sbr.rel (%p178) target = $region28
        $region27: #{tpu_custom_call.1} parent=23 // pred_region
          %p181 = scmp.lt.s32.totalorder %s24, 1
          %s182 = scalar_select %p181, %s24, 1
          %s183 = smul.addr %s182, 54
          %s184 = smul.addr %s183, 4
          %s185 = scalar_lea.vmem %s0, %s184
        $region28: #{tpu_custom_call.1} parent=23 // pred_fallthru
          _
      $region24: #{tpu_custom_call.1} parent=5 // pred_fallthru
        _
      %p186 = scmp.le.s32.totalorder 1, %s17
      %p187 = scmp.lt.s32.totalorder %s17, 3
      %p188 = pnand %p186, %p187
      %p189 = pneg %p188
      // Predicated region
      $region29: #{tpu_custom_call.1} parent=5 // pred_check
        _
      $region30: #{tpu_custom_call.1} parent=5 // pred_check_branch
        %191 = sbr.rel (%p188) target = $region32
      $region31: #{tpu_custom_call.1} parent=5 // pred_region
        %s192 = ssub.s32 %s17, 1
        %p193 = scmp.lt.s32.totalorder %s26, 1
        %s194 = scalar_select %p193, %s26, 1
        %s195 = smul.addr %s194, 54
        %s196 = smul.addr %s195, 4
        %s197 = scalar_lea.vmem %s0, %s196
        %p198 = pneg %p55
        %p199 = pneg %p52
        %p200 = pneg %p76
        %p201 = pneg %p73
        %p202 = pneg %p97
        %p203 = pneg %p94
        %p204 = pneg %p125
        %p205 = pneg %p122
        %s206 = sand.u32 %s112, 1
        %s207 = scalar_lea.sflag [#allocation3], %s206
        %s208 = sand.u32 %s112, 1
        %s209 = smul.addr %s208, 128
        %s210 = scalar_lea.vmem [#allocation2], %s209
        %p211 = pneg %p153
        %p212 = pneg %p150
        %s213 = sand.u32 %s140, 1
        %s214 = scalar_lea.sflag [#allocation5], %s213
        %s215 = sand.u32 %s140, 1
        %s216 = smul.addr %s215, 2
        %s217 = scalar_lea.vmem [#allocation4], %s216
        %p218 = scmp.lt.s32.totalorder %s26, 1
        %s219 = scalar_select %p218, %s26, 1
        %s220 = smul.addr %s219, 54
        %s221 = smul.addr %s220, 4
        %s222 = scalar_lea.vmem %s0, %s221
        %s223 = smul.u32 16, %s27
        %s224 = smul.u32 %s27, 16
        %v225 = vld [vmem:[%s1] sm:$0xff]
        %v226 = vld [vmem:[%s1 + $0x8] sm:$0x1]
        %s227 = smul.u32 %s224, 3
        %s228 = smul.addr %s227, 4
        %s229 = scalar_lea.vmem %s222, %s228
        %v230 = vld [vmem:[%s229] sm:$0xf]
        %v231 = vld [vmem:[%s229 + $0x4] sm:$0xf]
        %v232 = vld [vmem:[%s229 + $0x8] sm:$0x1]
        %v233 = vld [vmem:[%s229 + $0xc] sm:$0xf]
        %v234 = vld [vmem:[%s229 + $0x10] sm:$0xf]
        %v235 = vld [vmem:[%s229 + $0x14] sm:$0x1]
        %v236 = vld [vmem:[%s229 + $0x18] sm:$0xf]
        %v237 = vld [vmem:[%s229 + $0x1c] sm:$0xf]
        %v238 = vld [vmem:[%s229 + $0x20] sm:$0x1]
        %v239 = vld [vmem:[%s229 + $0x24] sm:$0xf]
        %v240 = vld [vmem:[%s229 + $0x28] sm:$0xf]
        %v241 = vld [vmem:[%s229 + $0x2c] sm:$0x1]
        %v242 = vld [vmem:[%s229 + $0x30] sm:$0xf]
        %v243 = vld [vmem:[%s229 + $0x34] sm:$0xf]
        %v244 = vld [vmem:[%s229 + $0x38] sm:$0x1]
        %v245 = vld [vmem:[%s229 + $0x3c] sm:$0xf]
        %v246 = vld [vmem:[%s229 + $0x40] sm:$0xf]
        %v247 = vld [vmem:[%s229 + $0x44] sm:$0x1]
        %v248 = vld [vmem:[%s229 + $0x48] sm:$0xf]
        %v249 = vld [vmem:[%s229 + $0x4c] sm:$0xf]
        %v250 = vld [vmem:[%s229 + $0x50] sm:$0x1]
        %v251 = vld [vmem:[%s229 + $0x54] sm:$0xf]
        %v252 = vld [vmem:[%s229 + $0x58] sm:$0xf]
        %v253 = vld [vmem:[%s229 + $0x5c] sm:$0x1]
        %v254 = vunpack.c.l.bf16 %v230
        %v255 = vunpack.c.l.bf16 %v231
        %v256 = vunpack.c.l.bf16 %v232
        %v257 = vunpack.c.l.bf16 %v233
        %v258 = vunpack.c.l.bf16 %v234
        %v259 = vunpack.c.l.bf16 %v235
        %v260 = vunpack.c.l.bf16 %v236
        %v261 = vunpack.c.l.bf16 %v237
        %v262 = vunpack.c.l.bf16 %v238
        %v263 = vunpack.c.l.bf16 %v239
        %v264 = vunpack.c.l.bf16 %v240
        %v265 = vunpack.c.l.bf16 %v241
        %v266 = vunpack.c.l.bf16 %v242
        %v267 = vunpack.c.l.bf16 %v243
        %v268 = vunpack.c.l.bf16 %v244
        %v269 = vunpack.c.l.bf16 %v245
        %v270 = vunpack.c.l.bf16 %v246
        %v271 = vunpack.c.l.bf16 %v247
        %v272 = vunpack.c.l.bf16 %v248
        %v273 = vunpack.c.l.bf16 %v249
        %v274 = vunpack.c.l.bf16 %v250
        %v275 = vunpack.c.l.bf16 %v251
        %v276 = vunpack.c.l.bf16 %v252
        %v277 = vunpack.c.l.bf16 %v253
        %v278 = vperm.slane %v225, 0
        %v279 = vmul.f32 %v254, %v278
        %v280 = vmul.f32 %v255, %v278
        %v281 = vmul.f32 %v257, %v278
        %v282 = vmul.f32 %v258, %v278
        %v283 = vmul.f32 %v260, %v278
        %v284 = vmul.f32 %v261, %v278
        %v285 = vmul.f32 %v263, %v278
        %v286 = vmul.f32 %v264, %v278
        %v287 = vmul.f32 %v266, %v278
        %v288 = vmul.f32 %v267, %v278
        %v289 = vmul.f32 %v269, %v278
        %v290 = vmul.f32 %v270, %v278
        %v291 = vmul.f32 %v272, %v278
        %v292 = vmul.f32 %v273, %v278
        %v293 = vmul.f32 %v275, %v278
        %v294 = vmul.f32 %v276, %v278
        %v295 = vadd.f32 %v279, 0.0
        %v296 = vadd.f32 %v280, 0.0
        %v297 = vadd.f32 %v281, 0.0
        %v298 = vadd.f32 %v282, 0.0
        %v299 = vadd.f32 %v283, 0.0
        %v300 = vadd.f32 %v284, 0.0
        %v301 = vadd.f32 %v285, 0.0
        %v302 = vadd.f32 %v286, 0.0
        %v303 = vadd.f32 %v287, 0.0
        %v304 = vadd.f32 %v288, 0.0
        %v305 = vadd.f32 %v289, 0.0
        %v306 = vadd.f32 %v290, 0.0
        %v307 = vadd.f32 %v291, 0.0
        %v308 = vadd.f32 %v292, 0.0
        %v309 = vadd.f32 %v293, 0.0
        %v310 = vadd.f32 %v294, 0.0
        %v311 = vperm.slane %v225, 1
        %v312 = vmul.f32 %v254, %v311
        %v313 = vmul.f32 %v255, %v311
        %v314 = vmul.f32 %v256, %v311
        %v315 = vmul.f32 %v257, %v311
        %v316 = vmul.f32 %v258, %v311
        %v317 = vmul.f32 %v259, %v311
        %v318 = vmul.f32 %v260, %v311
        %v319 = vmul.f32 %v261, %v311
        %v320 = vmul.f32 %v262, %v311
        %v321 = vmul.f32 %v263, %v311
        %v322 = vmul.f32 %v264, %v311
        %v323 = vmul.f32 %v265, %v311
        %v324 = vmul.f32 %v266, %v311
        %v325 = vmul.f32 %v267, %v311
        %v326 = vmul.f32 %v268, %v311
        %v327 = vmul.f32 %v269, %v311
        %v328 = vmul.f32 %v270, %v311
        %v329 = vmul.f32 %v271, %v311
        %v330 = vmul.f32 %v272, %v311
        %v331 = vmul.f32 %v273, %v311
        %v332 = vmul.f32 %v274, %v311
        %v333 = vmul.f32 %v275, %v311
        %v334 = vmul.f32 %v276, %v311
        %v335 = vmul.f32 %v277, %v311
        %vm360 = vcmask 1046528
        %v361 = vrot.slane %v312, 1
        %v362 = vrot.slane %v313, 1
        %v363 = vsel %vm360, %v361, %v362
        %v364 = vrot.slane %v314, 1
        %v365 = vsel %vm360, %v362, %v364
        %v366 = vrot.slane %v315, 1
        %v367 = vrot.slane %v316, 1
        %v368 = vsel %vm360, %v366, %v367
        %v369 = vrot.slane %v317, 1
        %v370 = vsel %vm360, %v367, %v369
        %v371 = vrot.slane %v318, 1
        %v372 = vrot.slane %v319, 1
        %v373 = vsel %vm360, %v371, %v372
        %v374 = vrot.slane %v320, 1
        %v375 = vsel %vm360, %v372, %v374
        %v376 = vrot.slane %v321, 1
        %v377 = vrot.slane %v322, 1
        %v378 = vsel %vm360, %v376, %v377
        %v379 = vrot.slane %v323, 1
        %v380 = vsel %vm360, %v377, %v379
        %v381 = vrot.slane %v324, 1
        %v382 = vrot.slane %v325, 1
        %v383 = vsel %vm360, %v381, %v382
        %v384 = vrot.slane %v326, 1
        %v385 = vsel %vm360, %v382, %v384
        %v386 = vrot.slane %v327, 1
        %v387 = vrot.slane %v328, 1
        %v388 = vsel %vm360, %v386, %v387
        %v389 = vrot.slane %v329, 1
        %v390 = vsel %vm360, %v387, %v389
        %v391 = vrot.slane %v330, 1
        %v392 = vrot.slane %v331, 1
        %v393 = vsel %vm360, %v391, %v392
        %v394 = vrot.slane %v332, 1
        %v395 = vsel %vm360, %v392, %v394
        %v396 = vrot.slane %v333, 1
        %v397 = vrot.slane %v334, 1
        %v398 = vsel %vm360, %v396, %v397
        %v399 = vrot.slane %v335, 1
        %v400 = vsel %vm360, %v397, %v399
        %v417 = vadd.f32 %v295, %v363
        %v418 = vadd.f32 %v296, %v365
        %v419 = vadd.f32 %v297, %v368
        %v420 = vadd.f32 %v298, %v370
        %v421 = vadd.f32 %v299, %v373
        %v422 = vadd.f32 %v300, %v375
        %v423 = vadd.f32 %v301, %v378
        %v424 = vadd.f32 %v302, %v380
        %v425 = vadd.f32 %v303, %v383
        %v426 = vadd.f32 %v304, %v385
        %v427 = vadd.f32 %v305, %v388
        %v428 = vadd.f32 %v306, %v390
        %v429 = vadd.f32 %v307, %v393
        %v430 = vadd.f32 %v308, %v395
        %v431 = vadd.f32 %v309, %v398
        %v432 = vadd.f32 %v310, %v400
        %v433 = vperm.slane %v225, 2
        %v434 = vmul.f32 %v254, %v433
        %v435 = vmul.f32 %v255, %v433
        %v436 = vmul.f32 %v256, %v433
        %v437 = vmul.f32 %v257, %v433
        %v438 = vmul.f32 %v258, %v433
        %v439 = vmul.f32 %v259, %v433
        %v440 = vmul.f32 %v260, %v433
        %v441 = vmul.f32 %v261, %v433
        %v442 = vmul.f32 %v262, %v433
        %v443 = vmul.f32 %v263, %v433
        %v444 = vmul.f32 %v264, %v433
        %v445 = vmul.f32 %v265, %v433
        %v446 = vmul.f32 %v266, %v433
        %v447 = vmul.f32 %v267, %v433
        %v448 = vmul.f32 %v268, %v433
        %v449 = vmul.f32 %v269, %v433
        %v450 = vmul.f32 %v270, %v433
        %v451 = vmul.f32 %v271, %v433
        %v452 = vmul.f32 %v272, %v433
        %v453 = vmul.f32 %v273, %v433
        %v454 = vmul.f32 %v274, %v433
        %v455 = vmul.f32 %v275, %v433
        %v456 = vmul.f32 %v276, %v433
        %v457 = vmul.f32 %v277, %v433
        %vm482 = vcmask 1045504
        %v483 = vrot.slane %v434, 2
        %v484 = vrot.slane %v435, 2
        %v485 = vsel %vm482, %v483, %v484
        %v486 = vrot.slane %v436, 2
        %v487 = vsel %vm482, %v484, %v486
        %v488 = vrot.slane %v437, 2
        %v489 = vrot.slane %v438, 2
        %v490 = vsel %vm482, %v488, %v489
        %v491 = vrot.slane %v439, 2
        %v492 = vsel %vm482, %v489, %v491
        %v493 = vrot.slane %v440, 2
        %v494 = vrot.slane %v441, 2
        %v495 = vsel %vm482, %v493, %v494
        %v496 = vrot.slane %v442, 2
        %v497 = vsel %vm482, %v494, %v496
        %v498 = vrot.slane %v443, 2
        %v499 = vrot.slane %v444, 2
        %v500 = vsel %vm482, %v498, %v499
        %v501 = vrot.slane %v445, 2
        %v502 = vsel %vm482, %v499, %v501
        %v503 = vrot.slane %v446, 2
        %v504 = vrot.slane %v447, 2
        %v505 = vsel %vm482, %v503, %v504
        %v506 = vrot.slane %v448, 2
        %v507 = vsel %vm482, %v504, %v506
        %v508 = vrot.slane %v449, 2
        %v509 = vrot.slane %v450, 2
        %v510 = vsel %vm482, %v508, %v509
        %v511 = vrot.slane %v451, 2
        %v512 = vsel %vm482, %v509, %v511
        %v513 = vrot.slane %v452, 2
        %v514 = vrot.slane %v453, 2
        %v515 = vsel %vm482, %v513, %v514
        %v516 = vrot.slane %v454, 2
        %v517 = vsel %vm482, %v514, %v516
        %v518 = vrot.slane %v455, 2
        %v519 = vrot.slane %v456, 2
        %v520 = vsel %vm482, %v518, %v519
        %v521 = vrot.slane %v457, 2
        %v522 = vsel %vm482, %v519, %v521
        %v539 = vadd.f32 %v417, %v485
        %v540 = vadd.f32 %v418, %v487
        %v541 = vadd.f32 %v419, %v490
        %v542 = vadd.f32 %v420, %v492
        %v543 = vadd.f32 %v421, %v495
        %v544 = vadd.f32 %v422, %v497
        %v545 = vadd.f32 %v423, %v500
        %v546 = vadd.f32 %v424, %v502
        %v547 = vadd.f32 %v425, %v505
        %v548 = vadd.f32 %v426, %v507
        %v549 = vadd.f32 %v427, %v510
        %v550 = vadd.f32 %v428, %v512
        %v551 = vadd.f32 %v429, %v515
        %v552 = vadd.f32 %v430, %v517
        %v553 = vadd.f32 %v431, %v520
        %v554 = vadd.f32 %v432, %v522
        %s555 = sadd.s32 %s224, 1
        %s556 = smul.u32 %s555, 3
        %s557 = smul.addr %s556, 4
        %s558 = scalar_lea.vmem %s222, %s557
        %v559 = vld [vmem:[%s558] sm:$0xf]
        %v560 = vld [vmem:[%s558 + $0x4] sm:$0xf]
        %v561 = vld [vmem:[%s558 + $0x8] sm:$0x1]
        %v562 = vld [vmem:[%s558 + $0xc] sm:$0xf]
        %v563 = vld [vmem:[%s558 + $0x10] sm:$0xf]
        %v564 = vld [vmem:[%s558 + $0x14] sm:$0x1]
        %v565 = vld [vmem:[%s558 + $0x18] sm:$0xf]
        %v566 = vld [vmem:[%s558 + $0x1c] sm:$0xf]
        %v567 = vld [vmem:[%s558 + $0x20] sm:$0x1]
        %v568 = vld [vmem:[%s558 + $0x24] sm:$0xf]
        %v569 = vld [vmem:[%s558 + $0x28] sm:$0xf]
        %v570 = vld [vmem:[%s558 + $0x2c] sm:$0x1]
        %v571 = vld [vmem:[%s558 + $0x30] sm:$0xf]
        %v572 = vld [vmem:[%s558 + $0x34] sm:$0xf]
        %v573 = vld [vmem:[%s558 + $0x38] sm:$0x1]
        %v574 = vld [vmem:[%s558 + $0x3c] sm:$0xf]
        %v575 = vld [vmem:[%s558 + $0x40] sm:$0xf]
        %v576 = vld [vmem:[%s558 + $0x44] sm:$0x1]
        %v577 = vld [vmem:[%s558 + $0x48] sm:$0xf]
        %v578 = vld [vmem:[%s558 + $0x4c] sm:$0xf]
        %v579 = vld [vmem:[%s558 + $0x50] sm:$0x1]
        %v580 = vld [vmem:[%s558 + $0x54] sm:$0xf]
        %v581 = vld [vmem:[%s558 + $0x58] sm:$0xf]
        %v582 = vld [vmem:[%s558 + $0x5c] sm:$0x1]
        %v583 = vunpack.c.l.bf16 %v559
        %v584 = vunpack.c.l.bf16 %v560
        %v585 = vunpack.c.l.bf16 %v561
        %v586 = vunpack.c.l.bf16 %v562
        %v587 = vunpack.c.l.bf16 %v563
        %v588 = vunpack.c.l.bf16 %v564
        %v589 = vunpack.c.l.bf16 %v565
        %v590 = vunpack.c.l.bf16 %v566
        %v591 = vunpack.c.l.bf16 %v567
        %v592 = vunpack.c.l.bf16 %v568
        %v593 = vunpack.c.l.bf16 %v569
        %v594 = vunpack.c.l.bf16 %v570
        %v595 = vunpack.c.l.bf16 %v571
        %v596 = vunpack.c.l.bf16 %v572
        %v597 = vunpack.c.l.bf16 %v573
        %v598 = vunpack.c.l.bf16 %v574
        %v599 = vunpack.c.l.bf16 %v575
        %v600 = vunpack.c.l.bf16 %v576
        %v601 = vunpack.c.l.bf16 %v577
        %v602 = vunpack.c.l.bf16 %v578
        %v603 = vunpack.c.l.bf16 %v579
        %v604 = vunpack.c.l.bf16 %v580
        %v605 = vunpack.c.l.bf16 %v581
        %v606 = vunpack.c.l.bf16 %v582
        %v607 = vperm.slane %v225, 3
        %v608 = vmul.f32 %v583, %v607
        %v609 = vmul.f32 %v584, %v607
        %v610 = vmul.f32 %v586, %v607
        %v611 = vmul.f32 %v587, %v607
        %v612 = vmul.f32 %v589, %v607
        %v613 = vmul.f32 %v590, %v607
        %v614 = vmul.f32 %v592, %v607
        %v615 = vmul.f32 %v593, %v607
        %v616 = vmul.f32 %v595, %v607
        %v617 = vmul.f32 %v596, %v607
        %v618 = vmul.f32 %v598, %v607
        %v619 = vmul.f32 %v599, %v607
        %v620 = vmul.f32 %v601, %v607
        %v621 = vmul.f32 %v602, %v607
        %v622 = vmul.f32 %v604, %v607
        %v623 = vmul.f32 %v605, %v607
        %v624 = vadd.f32 %v539, %v608
        %v625 = vadd.f32 %v540, %v609
        %v626 = vadd.f32 %v541, %v610
        %v627 = vadd.f32 %v542, %v611
        %v628 = vadd.f32 %v543, %v612
        %v629 = vadd.f32 %v544, %v613
        %v630 = vadd.f32 %v545, %v614
        %v631 = vadd.f32 %v546, %v615
        %v632 = vadd.f32 %v547, %v616
        %v633 = vadd.f32 %v548, %v617
        %v634 = vadd.f32 %v549, %v618
        %v635 = vadd.f32 %v550, %v619
        %v636 = vadd.f32 %v551, %v620
        %v637 = vadd.f32 %v552, %v621
        %v638 = vadd.f32 %v553, %v622
        %v639 = vadd.f32 %v554, %v623
        %v640 = vperm.slane %v225, 4
        %v641 = vmul.f32 %v583, %v640
        %v642 = vmul.f32 %v584, %v640
        %v643 = vmul.f32 %v585, %v640
        %v644 = vmul.f32 %v586, %v640
        %v645 = vmul.f32 %v587, %v640
        %v646 = vmul.f32 %v588, %v640
        %v647 = vmul.f32 %v589, %v640
        %v648 = vmul.f32 %v590, %v640
        %v649 = vmul.f32 %v591, %v640
        %v650 = vmul.f32 %v592, %v640
        %v651 = vmul.f32 %v593, %v640
        %v652 = vmul.f32 %v594, %v640
        %v653 = vmul.f32 %v595, %v640
        %v654 = vmul.f32 %v596, %v640
        %v655 = vmul.f32 %v597, %v640
        %v656 = vmul.f32 %v598, %v640
        %v657 = vmul.f32 %v599, %v640
        %v658 = vmul.f32 %v600, %v640
        %v659 = vmul.f32 %v601, %v640
        %v660 = vmul.f32 %v602, %v640
        %v661 = vmul.f32 %v603, %v640
        %v662 = vmul.f32 %v604, %v640
        %v663 = vmul.f32 %v605, %v640
        %v664 = vmul.f32 %v606, %v640
        %v689 = vrot.slane %v641, 1
        %v690 = vrot.slane %v642, 1
        %v691 = vsel %vm360, %v689, %v690
        %v692 = vrot.slane %v643, 1
        %v693 = vsel %vm360, %v690, %v692
        %v694 = vrot.slane %v644, 1
        %v695 = vrot.slane %v645, 1
        %v696 = vsel %vm360, %v694, %v695
        %v697 = vrot.slane %v646, 1
        %v698 = vsel %vm360, %v695, %v697
        %v699 = vrot.slane %v647, 1
        %v700 = vrot.slane %v648, 1
        %v701 = vsel %vm360, %v699, %v700
        %v702 = vrot.slane %v649, 1
        %v703 = vsel %vm360, %v700, %v702
        %v704 = vrot.slane %v650, 1
        %v705 = vrot.slane %v651, 1
        %v706 = vsel %vm360, %v704, %v705
        %v707 = vrot.slane %v652, 1
        %v708 = vsel %vm360, %v705, %v707
        %v709 = vrot.slane %v653, 1
        %v710 = vrot.slane %v654, 1
        %v711 = vsel %vm360, %v709, %v710
        %v712 = vrot.slane %v655, 1
        %v713 = vsel %vm360, %v710, %v712
        %v714 = vrot.slane %v656, 1
        %v715 = vrot.slane %v657, 1
        %v716 = vsel %vm360, %v714, %v715
        %v717 = vrot.slane %v658, 1
        %v718 = vsel %vm360, %v715, %v717
        %v719 = vrot.slane %v659, 1
        %v720 = vrot.slane %v660, 1
        %v721 = vsel %vm360, %v719, %v720
        %v722 = vrot.slane %v661, 1
        %v723 = vsel %vm360, %v720, %v722
        %v724 = vrot.slane %v662, 1
        %v725 = vrot.slane %v663, 1
        %v726 = vsel %vm360, %v724, %v725
        %v727 = vrot.slane %v664, 1
        %v728 = vsel %vm360, %v725, %v727
        %v745 = vadd.f32 %v624, %v691
        %v746 = vadd.f32 %v625, %v693
        %v747 = vadd.f32 %v626, %v696
        %v748 = vadd.f32 %v627, %v698
        %v749 = vadd.f32 %v628, %v701
        %v750 = vadd.f32 %v629, %v703
        %v751 = vadd.f32 %v630, %v706
        %v752 = vadd.f32 %v631, %v708
        %v753 = vadd.f32 %v632, %v711
        %v754 = vadd.f32 %v633, %v713
        %v755 = vadd.f32 %v634, %v716
        %v756 = vadd.f32 %v635, %v718
        %v757 = vadd.f32 %v636, %v721
        %v758 = vadd.f32 %v637, %v723
        %v759 = vadd.f32 %v638, %v726
        %v760 = vadd.f32 %v639, %v728
        %v761 = vperm.slane %v225, 5
        %v762 = vmul.f32 %v583, %v761
        %v763 = vmul.f32 %v584, %v761
        %v764 = vmul.f32 %v585, %v761
        %v765 = vmul.f32 %v586, %v761
        %v766 = vmul.f32 %v587, %v761
        %v767 = vmul.f32 %v588, %v761
        %v768 = vmul.f32 %v589, %v761
        %v769 = vmul.f32 %v590, %v761
        %v770 = vmul.f32 %v591, %v761
        %v771 = vmul.f32 %v592, %v761
        %v772 = vmul.f32 %v593, %v761
        %v773 = vmul.f32 %v594, %v761
        %v774 = vmul.f32 %v595, %v761
        %v775 = vmul.f32 %v596, %v761
        %v776 = vmul.f32 %v597, %v761
        %v777 = vmul.f32 %v598, %v761
        %v778 = vmul.f32 %v599, %v761
        %v779 = vmul.f32 %v600, %v761
        %v780 = vmul.f32 %v601, %v761
        %v781 = vmul.f32 %v602, %v761
        %v782 = vmul.f32 %v603, %v761
        %v783 = vmul.f32 %v604, %v761
        %v784 = vmul.f32 %v605, %v761
        %v785 = vmul.f32 %v606, %v761
        %v810 = vrot.slane %v762, 2
        %v811 = vrot.slane %v763, 2
        %v812 = vsel %vm482, %v810, %v811
        %v813 = vrot.slane %v764, 2
        %v814 = vsel %vm482, %v811, %v813
        %v815 = vrot.slane %v765, 2
        %v816 = vrot.slane %v766, 2
        %v817 = vsel %vm482, %v815, %v816
        %v818 = vrot.slane %v767, 2
        %v819 = vsel %vm482, %v816, %v818
        %v820 = vrot.slane %v768, 2
        %v821 = vrot.slane %v769, 2
        %v822 = vsel %vm482, %v820, %v821
        %v823 = vrot.slane %v770, 2
        %v824 = vsel %vm482, %v821, %v823
        %v825 = vrot.slane %v771, 2
        %v826 = vrot.slane %v772, 2
        %v827 = vsel %vm482, %v825, %v826
        %v828 = vrot.slane %v773, 2
        %v829 = vsel %vm482, %v826, %v828
        %v830 = vrot.slane %v774, 2
        %v831 = vrot.slane %v775, 2
        %v832 = vsel %vm482, %v830, %v831
        %v833 = vrot.slane %v776, 2
        %v834 = vsel %vm482, %v831, %v833
        %v835 = vrot.slane %v777, 2
        %v836 = vrot.slane %v778, 2
        %v837 = vsel %vm482, %v835, %v836
        %v838 = vrot.slane %v779, 2
        %v839 = vsel %vm482, %v836, %v838
        %v840 = vrot.slane %v780, 2
        %v841 = vrot.slane %v781, 2
        %v842 = vsel %vm482, %v840, %v841
        %v843 = vrot.slane %v782, 2
        %v844 = vsel %vm482, %v841, %v843
        %v845 = vrot.slane %v783, 2
        %v846 = vrot.slane %v784, 2
        %v847 = vsel %vm482, %v845, %v846
        %v848 = vrot.slane %v785, 2
        %v849 = vsel %vm482, %v846, %v848
        %v866 = vadd.f32 %v745, %v812
        %v867 = vadd.f32 %v746, %v814
        %v868 = vadd.f32 %v747, %v817
        %v869 = vadd.f32 %v748, %v819
        %v870 = vadd.f32 %v749, %v822
        %v871 = vadd.f32 %v750, %v824
        %v872 = vadd.f32 %v751, %v827
        %v873 = vadd.f32 %v752, %v829
        %v874 = vadd.f32 %v753, %v832
        %v875 = vadd.f32 %v754, %v834
        %v876 = vadd.f32 %v755, %v837
        %v877 = vadd.f32 %v756, %v839
        %v878 = vadd.f32 %v757, %v842
        %v879 = vadd.f32 %v758, %v844
        %v880 = vadd.f32 %v759, %v847
        %v881 = vadd.f32 %v760, %v849
        %s882 = sadd.s32 %s224, 2
        %s883 = smul.u32 %s882, 3
        %s884 = smul.addr %s883, 4
        %s885 = scalar_lea.vmem %s222, %s884
        %v886 = vld [vmem:[%s885] sm:$0xf]
        %v887 = vld [vmem:[%s885 + $0x4] sm:$0xf]
        %v888 = vld [vmem:[%s885 + $0x8] sm:$0x1]
        %v889 = vld [vmem:[%s885 + $0xc] sm:$0xf]
        %v890 = vld [vmem:[%s885 + $0x10] sm:$0xf]
        %v891 = vld [vmem:[%s885 + $0x14] sm:$0x1]
        %v892 = vld [vmem:[%s885 + $0x18] sm:$0xf]
        %v893 = vld [vmem:[%s885 + $0x1c] sm:$0xf]
        %v894 = vld [vmem:[%s885 + $0x20] sm:$0x1]
        %v895 = vld [vmem:[%s885 + $0x24] sm:$0xf]
        %v896 = vld [vmem:[%s885 + $0x28] sm:$0xf]
        %v897 = vld [vmem:[%s885 + $0x2c] sm:$0x1]
        %v898 = vld [vmem:[%s885 + $0x30] sm:$0xf]
        %v899 = vld [vmem:[%s885 + $0x34] sm:$0xf]
        %v900 = vld [vmem:[%s885 + $0x38] sm:$0x1]
        %v901 = vld [vmem:[%s885 + $0x3c] sm:$0xf]
        %v902 = vld [vmem:[%s885 + $0x40] sm:$0xf]
        %v903 = vld [vmem:[%s885 + $0x44] sm:$0x1]
        %v904 = vld [vmem:[%s885 + $0x48] sm:$0xf]
        %v905 = vld [vmem:[%s885 + $0x4c] sm:$0xf]
        %v906 = vld [vmem:[%s885 + $0x50] sm:$0x1]
        %v907 = vld [vmem:[%s885 + $0x54] sm:$0xf]
        %v908 = vld [vmem:[%s885 + $0x58] sm:$0xf]
        %v909 = vld [vmem:[%s885 + $0x5c] sm:$0x1]
        %v910 = vunpack.c.l.bf16 %v886
        %v911 = vunpack.c.l.bf16 %v887
        %v912 = vunpack.c.l.bf16 %v888
        %v913 = vunpack.c.l.bf16 %v889
        %v914 = vunpack.c.l.bf16 %v890
        %v915 = vunpack.c.l.bf16 %v891
        %v916 = vunpack.c.l.bf16 %v892
        %v917 = vunpack.c.l.bf16 %v893
        %v918 = vunpack.c.l.bf16 %v894
        %v919 = vunpack.c.l.bf16 %v895
        %v920 = vunpack.c.l.bf16 %v896
        %v921 = vunpack.c.l.bf16 %v897
        %v922 = vunpack.c.l.bf16 %v898
        %v923 = vunpack.c.l.bf16 %v899
        %v924 = vunpack.c.l.bf16 %v900
        %v925 = vunpack.c.l.bf16 %v901
        %v926 = vunpack.c.l.bf16 %v902
        %v927 = vunpack.c.l.bf16 %v903
        %v928 = vunpack.c.l.bf16 %v904
        %v929 = vunpack.c.l.bf16 %v905
        %v930 = vunpack.c.l.bf16 %v906
        %v931 = vunpack.c.l.bf16 %v907
        %v932 = vunpack.c.l.bf16 %v908
        %v933 = vunpack.c.l.bf16 %v909
        %v934 = vperm.slane %v225, 6
        %v935 = vmul.f32 %v910, %v934
        %v936 = vmul.f32 %v911, %v934
        %v937 = vmul.f32 %v913, %v934
        %v938 = vmul.f32 %v914, %v934
        %v939 = vmul.f32 %v916, %v934
        %v940 = vmul.f32 %v917, %v934
        %v941 = vmul.f32 %v919, %v934
        %v942 = vmul.f32 %v920, %v934
        %v943 = vmul.f32 %v922, %v934
        %v944 = vmul.f32 %v923, %v934
        %v945 = vmul.f32 %v925, %v934
        %v946 = vmul.f32 %v926, %v934
        %v947 = vmul.f32 %v928, %v934
        %v948 = vmul.f32 %v929, %v934
        %v949 = vmul.f32 %v931, %v934
        %v950 = vmul.f32 %v932, %v934
        %v951 = vadd.f32 %v866, %v935
        %v952 = vadd.f32 %v867, %v936
        %v953 = vadd.f32 %v868, %v937
        %v954 = vadd.f32 %v869, %v938
        %v955 = vadd.f32 %v870, %v939
        %v956 = vadd.f32 %v871, %v940
        %v957 = vadd.f32 %v872, %v941
        %v958 = vadd.f32 %v873, %v942
        %v959 = vadd.f32 %v874, %v943
        %v960 = vadd.f32 %v875, %v944
        %v961 = vadd.f32 %v876, %v945
        %v962 = vadd.f32 %v877, %v946
        %v963 = vadd.f32 %v878, %v947
        %v964 = vadd.f32 %v879, %v948
        %v965 = vadd.f32 %v880, %v949
        %v966 = vadd.f32 %v881, %v950
        %v967 = vperm.slane %v225, 7
        %v968 = vmul.f32 %v910, %v967
        %v969 = vmul.f32 %v911, %v967
        %v970 = vmul.f32 %v912, %v967
        %v971 = vmul.f32 %v913, %v967
        %v972 = vmul.f32 %v914, %v967
        %v973 = vmul.f32 %v915, %v967
        %v974 = vmul.f32 %v916, %v967
        %v975 = vmul.f32 %v917, %v967
        %v976 = vmul.f32 %v918, %v967
        %v977 = vmul.f32 %v919, %v967
        %v978 = vmul.f32 %v920, %v967
        %v979 = vmul.f32 %v921, %v967
        %v980 = vmul.f32 %v922, %v967
        %v981 = vmul.f32 %v923, %v967
        %v982 = vmul.f32 %v924, %v967
        %v983 = vmul.f32 %v925, %v967
        %v984 = vmul.f32 %v926, %v967
        %v985 = vmul.f32 %v927, %v967
        %v986 = vmul.f32 %v928, %v967
        %v987 = vmul.f32 %v929, %v967
        %v988 = vmul.f32 %v930, %v967
        %v989 = vmul.f32 %v931, %v967
        %v990 = vmul.f32 %v932, %v967
        %v991 = vmul.f32 %v933, %v967
        %v1016 = vrot.slane %v968, 1
        %v1017 = vrot.slane %v969, 1
        %v1018 = vsel %vm360, %v1016, %v1017
        %v1019 = vrot.slane %v970, 1
        %v1020 = vsel %vm360, %v1017, %v1019
        %v1021 = vrot.slane %v971, 1
        %v1022 = vrot.slane %v972, 1
        %v1023 = vsel %vm360, %v1021, %v1022
        %v1024 = vrot.slane %v973, 1
        %v1025 = vsel %vm360, %v1022, %v1024
        %v1026 = vrot.slane %v974, 1
        %v1027 = vrot.slane %v975, 1
        %v1028 = vsel %vm360, %v1026, %v1027
        %v1029 = vrot.slane %v976, 1
        %v1030 = vsel %vm360, %v1027, %v1029
        %v1031 = vrot.slane %v977, 1
        %v1032 = vrot.slane %v978, 1
        %v1033 = vsel %vm360, %v1031, %v1032
        %v1034 = vrot.slane %v979, 1
        %v1035 = vsel %vm360, %v1032, %v1034
        %v1036 = vrot.slane %v980, 1
        %v1037 = vrot.slane %v981, 1
        %v1038 = vsel %vm360, %v1036, %v1037
        %v1039 = vrot.slane %v982, 1
        %v1040 = vsel %vm360, %v1037, %v1039
        %v1041 = vrot.slane %v983, 1
        %v1042 = vrot.slane %v984, 1
        %v1043 = vsel %vm360, %v1041, %v1042
        %v1044 = vrot.slane %v985, 1
        %v1045 = vsel %vm360, %v1042, %v1044
        %v1046 = vrot.slane %v986, 1
        %v1047 = vrot.slane %v987, 1
        %v1048 = vsel %vm360, %v1046, %v1047
        %v1049 = vrot.slane %v988, 1
        %v1050 = vsel %vm360, %v1047, %v1049
        %v1051 = vrot.slane %v989, 1
        %v1052 = vrot.slane %v990, 1
        %v1053 = vsel %vm360, %v1051, %v1052
        %v1054 = vrot.slane %v991, 1
        %v1055 = vsel %vm360, %v1052, %v1054
        %v1072 = vadd.f32 %v951, %v1018
        %v1073 = vadd.f32 %v952, %v1020
        %v1074 = vadd.f32 %v953, %v1023
        %v1075 = vadd.f32 %v954, %v1025
        %v1076 = vadd.f32 %v955, %v1028
        %v1077 = vadd.f32 %v956, %v1030
        %v1078 = vadd.f32 %v957, %v1033
        %v1079 = vadd.f32 %v958, %v1035
        %v1080 = vadd.f32 %v959, %v1038
        %v1081 = vadd.f32 %v960, %v1040
        %v1082 = vadd.f32 %v961, %v1043
        %v1083 = vadd.f32 %v962, %v1045
        %v1084 = vadd.f32 %v963, %v1048
        %v1085 = vadd.f32 %v964, %v1050
        %v1086 = vadd.f32 %v965, %v1053
        %v1087 = vadd.f32 %v966, %v1055
        %v1088 = vperm.slane %v226, 0
        %v1089 = vmul.f32 %v910, %v1088
        %v1090 = vmul.f32 %v911, %v1088
        %v1091 = vmul.f32 %v912, %v1088
        %v1092 = vmul.f32 %v913, %v1088
        %v1093 = vmul.f32 %v914, %v1088
        %v1094 = vmul.f32 %v915, %v1088
        %v1095 = vmul.f32 %v916, %v1088
        %v1096 = vmul.f32 %v917, %v1088
        %v1097 = vmul.f32 %v918, %v1088
        %v1098 = vmul.f32 %v919, %v1088
        %v1099 = vmul.f32 %v920, %v1088
        %v1100 = vmul.f32 %v921, %v1088
        %v1101 = vmul.f32 %v922, %v1088
        %v1102 = vmul.f32 %v923, %v1088
        %v1103 = vmul.f32 %v924, %v1088
        %v1104 = vmul.f32 %v925, %v1088
        %v1105 = vmul.f32 %v926, %v1088
        %v1106 = vmul.f32 %v927, %v1088
        %v1107 = vmul.f32 %v928, %v1088
        %v1108 = vmul.f32 %v929, %v1088
        %v1109 = vmul.f32 %v930, %v1088
        %v1110 = vmul.f32 %v931, %v1088
        %v1111 = vmul.f32 %v932, %v1088
        %v1112 = vmul.f32 %v933, %v1088
        %v1137 = vrot.slane %v1089, 2
        %v1138 = vrot.slane %v1090, 2
        %v1139 = vsel %vm482, %v1137, %v1138
        %v1140 = vrot.slane %v1091, 2
        %v1141 = vsel %vm482, %v1138, %v1140
        %v1142 = vrot.slane %v1092, 2
        %v1143 = vrot.slane %v1093, 2
        %v1144 = vsel %vm482, %v1142, %v1143
        %v1145 = vrot.slane %v1094, 2
        %v1146 = vsel %vm482, %v1143, %v1145
        %v1147 = vrot.slane %v1095, 2
        %v1148 = vrot.slane %v1096, 2
        %v1149 = vsel %vm482, %v1147, %v1148
        %v1150 = vrot.slane %v1097, 2
        %v1151 = vsel %vm482, %v1148, %v1150
        %v1152 = vrot.slane %v1098, 2
        %v1153 = vrot.slane %v1099, 2
        %v1154 = vsel %vm482, %v1152, %v1153
        %v1155 = vrot.slane %v1100, 2
        %v1156 = vsel %vm482, %v1153, %v1155
        %v1157 = vrot.slane %v1101, 2
        %v1158 = vrot.slane %v1102, 2
        %v1159 = vsel %vm482, %v1157, %v1158
        %v1160 = vrot.slane %v1103, 2
        %v1161 = vsel %vm482, %v1158, %v1160
        %v1162 = vrot.slane %v1104, 2
        %v1163 = vrot.slane %v1105, 2
        %v1164 = vsel %vm482, %v1162, %v1163
        %v1165 = vrot.slane %v1106, 2
        %v1166 = vsel %vm482, %v1163, %v1165
        %v1167 = vrot.slane %v1107, 2
        %v1168 = vrot.slane %v1108, 2
        %v1169 = vsel %vm482, %v1167, %v1168
        %v1170 = vrot.slane %v1109, 2
        %v1171 = vsel %vm482, %v1168, %v1170
        %v1172 = vrot.slane %v1110, 2
        %v1173 = vrot.slane %v1111, 2
        %v1174 = vsel %vm482, %v1172, %v1173
        %v1175 = vrot.slane %v1112, 2
        %v1176 = vsel %vm482, %v1173, %v1175
        %v1193 = vadd.f32 %v1072, %v1139
        %v1194 = vadd.f32 %v1073, %v1141
        %v1195 = vadd.f32 %v1074, %v1144
        %v1196 = vadd.f32 %v1075, %v1146
        %v1197 = vadd.f32 %v1076, %v1149
        %v1198 = vadd.f32 %v1077, %v1151
        %v1199 = vadd.f32 %v1078, %v1154
        %v1200 = vadd.f32 %v1079, %v1156
        %v1201 = vadd.f32 %v1080, %v1159
        %v1202 = vadd.f32 %v1081, %v1161
        %v1203 = vadd.f32 %v1082, %v1164
        %v1204 = vadd.f32 %v1083, %v1166
        %v1205 = vadd.f32 %v1084, %v1169
        %v1206 = vadd.f32 %v1085, %v1171
        %v1207 = vadd.f32 %v1086, %v1174
        %v1208 = vadd.f32 %v1087, %v1176
        %v1209 = vpack.c.bf16 %v1194, %v1193
        %v1210 = vpack.c.bf16 %v1196, %v1195
        %v1211 = vpack.c.bf16 %v1198, %v1197
        %v1212 = vpack.c.bf16 %v1200, %v1199
        %v1213 = vpack.c.bf16 %v1202, %v1201
        %v1214 = vpack.c.bf16 %v1204, %v1203
        %v1215 = vpack.c.bf16 %v1206, %v1205
        %v1216 = vpack.c.bf16 %v1208, %v1207
        %v1217 = vld [vmem:[%s2] sm:$0xf]
        %v1218 = vld [vmem:[%s2 + $0x4] sm:$0xf]
        %v1219 = vld [vmem:[%s2 + $0x8] sm:$0xf]
        %v1220 = vld [vmem:[%s2 + $0xc] sm:$0xf]
        %v1221 = vld [vmem:[%s2 + $0x10] sm:$0xf]
        %v1222 = vld [vmem:[%s2 + $0x14] sm:$0xf]
        %v1223 = vld [vmem:[%s2 + $0x18] sm:$0xf]
        %v1224 = vld [vmem:[%s2 + $0x1c] sm:$0xf]
        %v1225 = vld [vmem:[%s2 + $0x20] sm:$0xf]
        %v1226 = vld [vmem:[%s2 + $0x24] sm:$0xf]
        %v1227 = vld [vmem:[%s2 + $0x28] sm:$0xf]
        %v1228 = vld [vmem:[%s2 + $0x2c] sm:$0xf]
        %v1229 = vld [vmem:[%s2 + $0x30] sm:$0xf]
        %v1230 = vld [vmem:[%s2 + $0x34] sm:$0xf]
        %v1231 = vld [vmem:[%s2 + $0x38] sm:$0xf]
        %v1232 = vld [vmem:[%s2 + $0x3c] sm:$0xf]
        %v1249 = vunpack.c.l.b16 %v1217
        %v1250 = vunpack.c.l.b16 %v1218
        %v1251 = vunpack.c.l.b16 %v1219
        %v1252 = vunpack.c.l.b16 %v1220
        %v1253 = vunpack.c.l.b16 %v1221
        %v1254 = vunpack.c.l.b16 %v1222
        %v1255 = vunpack.c.l.b16 %v1223
        %v1256 = vunpack.c.l.b16 %v1224
        %v1257 = vunpack.c.l.b16 %v1225
        %v1258 = vunpack.c.l.b16 %v1226
        %v1259 = vunpack.c.l.b16 %v1227
        %v1260 = vunpack.c.l.b16 %v1228
        %v1261 = vunpack.c.l.b16 %v1229
        %v1262 = vunpack.c.l.b16 %v1230
        %v1263 = vunpack.c.l.b16 %v1231
        %v1264 = vunpack.c.l.b16 %v1232
        %v1265 = vpack.c.b16 %v1250, %v1249
        %v1266 = vpack.c.b16 %v1252, %v1251
        %v1267 = vpack.c.b16 %v1254, %v1253
        %v1268 = vpack.c.b16 %v1256, %v1255
        %v1269 = vpack.c.b16 %v1258, %v1257
        %v1270 = vpack.c.b16 %v1260, %v1259
        %v1271 = vpack.c.b16 %v1262, %v1261
        %v1272 = vpack.c.b16 %v1264, %v1263
        %1281 = vmatpush.bf16.msra.mxu0 %v1272
        %1282 = vmatpush.bf16.msra.mxu0 %v1271
        %1283 = vmatpush.bf16.msra.mxu0 %v1270
        %1284 = vmatpush.bf16.msra.mxu0 %v1269
        %1285 = vmatpush.bf16.msra.mxu0 %v1268
        %1286 = vmatpush.bf16.msra.mxu0 %v1267
        %1287 = vmatpush.bf16.msra.mxu0 %v1266
        %1288 = vmatpush.bf16.msra.mxu0 %v1265
        %1289 = vmatmul.bf16.gmra.mxu0 %v1209
        %v1290 = vpop.f32.mrf.mxu0
        %v1291 = vadd.f32 0.0, %v1290
        %v1292 = vpop.f32.mrf.mxu0
        %v1293 = vadd.f32 0.0, %v1292
        %1294 = vmatmul.bf16.gmra.mxu0 %v1210
        %v1295 = vpop.f32.mrf.mxu0
        %v1296 = vadd.f32 0.0, %v1295
        %v1297 = vpop.f32.mrf.mxu0
        %v1298 = vadd.f32 0.0, %v1297
        %1299 = vmatmul.bf16.gmra.mxu0 %v1211
        %v1300 = vpop.f32.mrf.mxu0
        %v1301 = vadd.f32 0.0, %v1300
        %v1302 = vpop.f32.mrf.mxu0
        %v1303 = vadd.f32 0.0, %v1302
        %1304 = vmatmul.bf16.gmra.mxu0 %v1212
        %v1305 = vpop.f32.mrf.mxu0
        %v1306 = vadd.f32 0.0, %v1305
        %v1307 = vpop.f32.mrf.mxu0
        %v1308 = vadd.f32 0.0, %v1307
        %1309 = vmatmul.bf16.gmra.mxu0 %v1213
        %v1310 = vpop.f32.mrf.mxu0
        %v1311 = vadd.f32 0.0, %v1310
        %v1312 = vpop.f32.mrf.mxu0
        %v1313 = vadd.f32 0.0, %v1312
        %1314 = vmatmul.bf16.gmra.mxu0 %v1214
        %v1315 = vpop.f32.mrf.mxu0
        %v1316 = vadd.f32 0.0, %v1315
        %v1317 = vpop.f32.mrf.mxu0
        %v1318 = vadd.f32 0.0, %v1317
        %1319 = vmatmul.bf16.gmra.mxu0 %v1215
        %v1320 = vpop.f32.mrf.mxu0
        %v1321 = vadd.f32 0.0, %v1320
        %v1322 = vpop.f32.mrf.mxu0
        %v1323 = vadd.f32 0.0, %v1322
        %1324 = vmatmul.bf16.gmra.mxu0 %v1216
        %v1325 = vpop.f32.mrf.mxu0
        %v1326 = vadd.f32 0.0, %v1325
        %v1327 = vpop.f32.mrf.mxu0
        %v1328 = vadd.f32 0.0, %v1327
        %1329 = vdwg.mxu0
        %v1330 = vadd.f32 %v1291, %v1293
        %v1331 = vadd.f32 %v1330, %v1296
        %v1332 = vadd.f32 %v1331, %v1298
        %v1333 = vadd.f32 %v1332, %v1301
        %v1334 = vadd.f32 %v1333, %v1303
        %v1335 = vadd.f32 %v1334, %v1306
        %v1336 = vadd.f32 %v1335, %v1308
        %v1337 = vadd.f32 %v1336, %v1311
        %v1338 = vadd.f32 %v1337, %v1313
        %v1339 = vadd.f32 %v1338, %v1316
        %v1340 = vadd.f32 %v1339, %v1318
        %v1341 = vadd.f32 %v1340, %v1321
        %v1342 = vadd.f32 %v1341, %v1323
        %v1343 = vadd.f32 %v1342, %v1326
        %v1344 = vadd.f32 %v1343, %v1328
        %v1345 = vrot.slane %v1344, 4
        %v1346 = vadd.f32 %v1344, %v1345
        %v1347 = vrot.slane %v1346, 2
        %v1348 = vadd.f32 %v1346, %v1347
        %v1349 = vrot.slane %v1348, 1
        %v1350 = vadd.f32 %v1348, %v1349
        %v1351 = vadd.f32 %v1350, 0.0
        %v1352 = vmul.f32 %v1291, %v1291
        %v1353 = vmul.f32 %v1293, %v1293
        %v1354 = vmul.f32 %v1296, %v1296
        %v1355 = vmul.f32 %v1298, %v1298
        %v1356 = vmul.f32 %v1301, %v1301
        %v1357 = vmul.f32 %v1303, %v1303
        %v1358 = vmul.f32 %v1306, %v1306
        %v1359 = vmul.f32 %v1308, %v1308
        %v1360 = vmul.f32 %v1311, %v1311
        %v1361 = vmul.f32 %v1313, %v1313
        %v1362 = vmul.f32 %v1316, %v1316
        %v1363 = vmul.f32 %v1318, %v1318
        %v1364 = vmul.f32 %v1321, %v1321
        %v1365 = vmul.f32 %v1323, %v1323
        %v1366 = vmul.f32 %v1326, %v1326
        %v1367 = vmul.f32 %v1328, %v1328
        %v1368 = vadd.f32 %v1352, %v1353
        %v1369 = vadd.f32 %v1368, %v1354
        %v1370 = vadd.f32 %v1369, %v1355
        %v1371 = vadd.f32 %v1370, %v1356
        %v1372 = vadd.f32 %v1371, %v1357
        %v1373 = vadd.f32 %v1372, %v1358
        %v1374 = vadd.f32 %v1373, %v1359
        %v1375 = vadd.f32 %v1374, %v1360
        %v1376 = vadd.f32 %v1375, %v1361
        %v1377 = vadd.f32 %v1376, %v1362
        %v1378 = vadd.f32 %v1377, %v1363
        %v1379 = vadd.f32 %v1378, %v1364
        %v1380 = vadd.f32 %v1379, %v1365
        %v1381 = vadd.f32 %v1380, %v1366
        %v1382 = vadd.f32 %v1381, %v1367
        %v1383 = vrot.slane %v1382, 4
        %v1384 = vadd.f32 %v1382, %v1383
        %v1385 = vrot.slane %v1384, 2
        %v1386 = vadd.f32 %v1384, %v1385
        %v1387 = vrot.slane %v1386, 1
        %v1388 = vadd.f32 %v1386, %v1387
        %v1389 = vadd.f32 %v1388, 0.0
        %v1390 = vpack.c.bf16 %v1291, %v1291
        %v1391 = vpack.c.bf16 %v1293, %v1293
        %v1392 = vpack.c.bf16 %v1296, %v1296
        %v1393 = vpack.c.bf16 %v1298, %v1298
        %v1394 = vpack.c.bf16 %v1301, %v1301
        %v1395 = vpack.c.bf16 %v1303, %v1303
        %v1396 = vpack.c.bf16 %v1306, %v1306
        %v1397 = vpack.c.bf16 %v1308, %v1308
        %v1398 = vpack.c.bf16 %v1311, %v1311
        %v1399 = vpack.c.bf16 %v1313, %v1313
        %v1400 = vpack.c.bf16 %v1316, %v1316
        %v1401 = vpack.c.bf16 %v1318, %v1318
        %v1402 = vpack.c.bf16 %v1321, %v1321
        %v1403 = vpack.c.bf16 %v1323, %v1323
        %v1404 = vpack.c.bf16 %v1326, %v1326
        %v1405 = vpack.c.bf16 %v1328, %v1328
        %1406 = vst [vmem:[%s210] sm:$0xf] %v1390
        %1407 = vst [vmem:[%s210 + $0x4] sm:$0xf] %v1391
        %1408 = vst [vmem:[%s210 + $0x8] sm:$0xf] %v1392
        %1409 = vst [vmem:[%s210 + $0xc] sm:$0xf] %v1393
        %1410 = vst [vmem:[%s210 + $0x10] sm:$0xf] %v1394
        %1411 = vst [vmem:[%s210 + $0x14] sm:$0xf] %v1395
        %1412 = vst [vmem:[%s210 + $0x18] sm:$0xf] %v1396
        %1413 = vst [vmem:[%s210 + $0x1c] sm:$0xf] %v1397
        %1414 = vst [vmem:[%s210 + $0x20] sm:$0xf] %v1398
        %1415 = vst [vmem:[%s210 + $0x24] sm:$0xf] %v1399
        %1416 = vst [vmem:[%s210 + $0x28] sm:$0xf] %v1400
        %1417 = vst [vmem:[%s210 + $0x2c] sm:$0xf] %v1401
        %1418 = vst [vmem:[%s210 + $0x30] sm:$0xf] %v1402
        %1419 = vst [vmem:[%s210 + $0x34] sm:$0xf] %v1403
        %1420 = vst [vmem:[%s210 + $0x38] sm:$0xf] %v1404
        %1421 = vst [vmem:[%s210 + $0x3c] sm:$0xf] %v1405
        %s1422 = sadd.s32 %s224, 8
        %s1423 = smul.u32 %s1422, 3
        %s1424 = smul.addr %s1423, 4
        %s1425 = scalar_lea.vmem %s222, %s1424
        %v1426 = vld [vmem:[%s1425] sm:$0xf]
        %v1427 = vld [vmem:[%s1425 + $0x4] sm:$0xf]
        %v1428 = vld [vmem:[%s1425 + $0x8] sm:$0x1]
        %v1429 = vld [vmem:[%s1425 + $0xc] sm:$0xf]
        %v1430 = vld [vmem:[%s1425 + $0x10] sm:$0xf]
        %v1431 = vld [vmem:[%s1425 + $0x14] sm:$0x1]
        %v1432 = vld [vmem:[%s1425 + $0x18] sm:$0xf]
        %v1433 = vld [vmem:[%s1425 + $0x1c] sm:$0xf]
        %v1434 = vld [vmem:[%s1425 + $0x20] sm:$0x1]
        %v1435 = vld [vmem:[%s1425 + $0x24] sm:$0xf]
        %v1436 = vld [vmem:[%s1425 + $0x28] sm:$0xf]
        %v1437 = vld [vmem:[%s1425 + $0x2c] sm:$0x1]
        %v1438 = vld [vmem:[%s1425 + $0x30] sm:$0xf]
        %v1439 = vld [vmem:[%s1425 + $0x34] sm:$0xf]
        %v1440 = vld [vmem:[%s1425 + $0x38] sm:$0x1]
        %v1441 = vld [vmem:[%s1425 + $0x3c] sm:$0xf]
        %v1442 = vld [vmem:[%s1425 + $0x40] sm:$0xf]
        %v1443 = vld [vmem:[%s1425 + $0x44] sm:$0x1]
        %v1444 = vld [vmem:[%s1425 + $0x48] sm:$0xf]
        %v1445 = vld [vmem:[%s1425 + $0x4c] sm:$0xf]
        %v1446 = vld [vmem:[%s1425 + $0x50] sm:$0x1]
        %v1447 = vld [vmem:[%s1425 + $0x54] sm:$0xf]
        %v1448 = vld [vmem:[%s1425 + $0x58] sm:$0xf]
        %v1449 = vld [vmem:[%s1425 + $0x5c] sm:$0x1]
        %v1450 = vunpack.c.l.bf16 %v1426
        %v1451 = vunpack.c.l.bf16 %v1427
        %v1452 = vunpack.c.l.bf16 %v1428
        %v1453 = vunpack.c.l.bf16 %v1429
        %v1454 = vunpack.c.l.bf16 %v1430
        %v1455 = vunpack.c.l.bf16 %v1431
        %v1456 = vunpack.c.l.bf16 %v1432
        %v1457 = vunpack.c.l.bf16 %v1433
        %v1458 = vunpack.c.l.bf16 %v1434
        %v1459 = vunpack.c.l.bf16 %v1435
        %v1460 = vunpack.c.l.bf16 %v1436
        %v1461 = vunpack.c.l.bf16 %v1437
        %v1462 = vunpack.c.l.bf16 %v1438
        %v1463 = vunpack.c.l.bf16 %v1439
        %v1464 = vunpack.c.l.bf16 %v1440
        %v1465 = vunpack.c.l.bf16 %v1441
        %v1466 = vunpack.c.l.bf16 %v1442
        %v1467 = vunpack.c.l.bf16 %v1443
        %v1468 = vunpack.c.l.bf16 %v1444
        %v1469 = vunpack.c.l.bf16 %v1445
        %v1470 = vunpack.c.l.bf16 %v1446
        %v1471 = vunpack.c.l.bf16 %v1447
        %v1472 = vunpack.c.l.bf16 %v1448
        %v1473 = vunpack.c.l.bf16 %v1449
        %v1474 = vmul.f32 %v1450, %v278
        %v1475 = vmul.f32 %v1451, %v278
        %v1476 = vmul.f32 %v1453, %v278
        %v1477 = vmul.f32 %v1454, %v278
        %v1478 = vmul.f32 %v1456, %v278
        %v1479 = vmul.f32 %v1457, %v278
        %v1480 = vmul.f32 %v1459, %v278
        %v1481 = vmul.f32 %v1460, %v278
        %v1482 = vmul.f32 %v1462, %v278
        %v1483 = vmul.f32 %v1463, %v278
        %v1484 = vmul.f32 %v1465, %v278
        %v1485 = vmul.f32 %v1466, %v278
        %v1486 = vmul.f32 %v1468, %v278
        %v1487 = vmul.f32 %v1469, %v278
        %v1488 = vmul.f32 %v1471, %v278
        %v1489 = vmul.f32 %v1472, %v278
        %v1490 = vadd.f32 %v1474, 0.0
        %v1491 = vadd.f32 %v1475, 0.0
        %v1492 = vadd.f32 %v1476, 0.0
        %v1493 = vadd.f32 %v1477, 0.0
        %v1494 = vadd.f32 %v1478, 0.0
        %v1495 = vadd.f32 %v1479, 0.0
        %v1496 = vadd.f32 %v1480, 0.0
        %v1497 = vadd.f32 %v1481, 0.0
        %v1498 = vadd.f32 %v1482, 0.0
        %v1499 = vadd.f32 %v1483, 0.0
        %v1500 = vadd.f32 %v1484, 0.0
        %v1501 = vadd.f32 %v1485, 0.0
        %v1502 = vadd.f32 %v1486, 0.0
        %v1503 = vadd.f32 %v1487, 0.0
        %v1504 = vadd.f32 %v1488, 0.0
        %v1505 = vadd.f32 %v1489, 0.0
        %v1506 = vmul.f32 %v1450, %v311
        %v1507 = vmul.f32 %v1451, %v311
        %v1508 = vmul.f32 %v1452, %v311
        %v1509 = vmul.f32 %v1453, %v311
        %v1510 = vmul.f32 %v1454, %v311
        %v1511 = vmul.f32 %v1455, %v311
        %v1512 = vmul.f32 %v1456, %v311
        %v1513 = vmul.f32 %v1457, %v311
        %v1514 = vmul.f32 %v1458, %v311
        %v1515 = vmul.f32 %v1459, %v311
        %v1516 = vmul.f32 %v1460, %v311
        %v1517 = vmul.f32 %v1461, %v311
        %v1518 = vmul.f32 %v1462, %v311
        %v1519 = vmul.f32 %v1463, %v311
        %v1520 = vmul.f32 %v1464, %v311
        %v1521 = vmul.f32 %v1465, %v311
        %v1522 = vmul.f32 %v1466, %v311
        %v1523 = vmul.f32 %v1467, %v311
        %v1524 = vmul.f32 %v1468, %v311
        %v1525 = vmul.f32 %v1469, %v311
        %v1526 = vmul.f32 %v1470, %v311
        %v1527 = vmul.f32 %v1471, %v311
        %v1528 = vmul.f32 %v1472, %v311
        %v1529 = vmul.f32 %v1473, %v311
        %v1554 = vrot.slane %v1506, 1
        %v1555 = vrot.slane %v1507, 1
        %v1556 = vsel %vm360, %v1554, %v1555
        %v1557 = vrot.slane %v1508, 1
        %v1558 = vsel %vm360, %v1555, %v1557
        %v1559 = vrot.slane %v1509, 1
        %v1560 = vrot.slane %v1510, 1
        %v1561 = vsel %vm360, %v1559, %v1560
        %v1562 = vrot.slane %v1511, 1
        %v1563 = vsel %vm360, %v1560, %v1562
        %v1564 = vrot.slane %v1512, 1
        %v1565 = vrot.slane %v1513, 1
        %v1566 = vsel %vm360, %v1564, %v1565
        %v1567 = vrot.slane %v1514, 1
        %v1568 = vsel %vm360, %v1565, %v1567
        %v1569 = vrot.slane %v1515, 1
        %v1570 = vrot.slane %v1516, 1
        %v1571 = vsel %vm360, %v1569, %v1570
        %v1572 = vrot.slane %v1517, 1
        %v1573 = vsel %vm360, %v1570, %v1572
        %v1574 = vrot.slane %v1518, 1
        %v1575 = vrot.slane %v1519, 1
        %v1576 = vsel %vm360, %v1574, %v1575
        %v1577 = vrot.slane %v1520, 1
        %v1578 = vsel %vm360, %v1575, %v1577
        %v1579 = vrot.slane %v1521, 1
        %v1580 = vrot.slane %v1522, 1
        %v1581 = vsel %vm360, %v1579, %v1580
        %v1582 = vrot.slane %v1523, 1
        %v1583 = vsel %vm360, %v1580, %v1582
        %v1584 = vrot.slane %v1524, 1
        %v1585 = vrot.slane %v1525, 1
        %v1586 = vsel %vm360, %v1584, %v1585
        %v1587 = vrot.slane %v1526, 1
        %v1588 = vsel %vm360, %v1585, %v1587
        %v1589 = vrot.slane %v1527, 1
        %v1590 = vrot.slane %v1528, 1
        %v1591 = vsel %vm360, %v1589, %v1590
        %v1592 = vrot.slane %v1529, 1
        %v1593 = vsel %vm360, %v1590, %v1592
        %v1610 = vadd.f32 %v1490, %v1556
        %v1611 = vadd.f32 %v1491, %v1558
        %v1612 = vadd.f32 %v1492, %v1561
        %v1613 = vadd.f32 %v1493, %v1563
        %v1614 = vadd.f32 %v1494, %v1566
        %v1615 = vadd.f32 %v1495, %v1568
        %v1616 = vadd.f32 %v1496, %v1571
        %v1617 = vadd.f32 %v1497, %v1573
        %v1618 = vadd.f32 %v1498, %v1576
        %v1619 = vadd.f32 %v1499, %v1578
        %v1620 = vadd.f32 %v1500, %v1581
        %v1621 = vadd.f32 %v1501, %v1583
        %v1622 = vadd.f32 %v1502, %v1586
        %v1623 = vadd.f32 %v1503, %v1588
        %v1624 = vadd.f32 %v1504, %v1591
        %v1625 = vadd.f32 %v1505, %v1593
        %v1626 = vmul.f32 %v1450, %v433
        %v1627 = vmul.f32 %v1451, %v433
        %v1628 = vmul.f32 %v1452, %v433
        %v1629 = vmul.f32 %v1453, %v433
        %v1630 = vmul.f32 %v1454, %v433
        %v1631 = vmul.f32 %v1455, %v433
        %v1632 = vmul.f32 %v1456, %v433
        %v1633 = vmul.f32 %v1457, %v433
        %v1634 = vmul.f32 %v1458, %v433
        %v1635 = vmul.f32 %v1459, %v433
        %v1636 = vmul.f32 %v1460, %v433
        %v1637 = vmul.f32 %v1461, %v433
        %v1638 = vmul.f32 %v1462, %v433
        %v1639 = vmul.f32 %v1463, %v433
        %v1640 = vmul.f32 %v1464, %v433
        %v1641 = vmul.f32 %v1465, %v433
        %v1642 = vmul.f32 %v1466, %v433
        %v1643 = vmul.f32 %v1467, %v433
        %v1644 = vmul.f32 %v1468, %v433
        %v1645 = vmul.f32 %v1469, %v433
        %v1646 = vmul.f32 %v1470, %v433
        %v1647 = vmul.f32 %v1471, %v433
        %v1648 = vmul.f32 %v1472, %v433
        %v1649 = vmul.f32 %v1473, %v433
        %v1674 = vrot.slane %v1626, 2
        %v1675 = vrot.slane %v1627, 2
        %v1676 = vsel %vm482, %v1674, %v1675
        %v1677 = vrot.slane %v1628, 2
        %v1678 = vsel %vm482, %v1675, %v1677
        %v1679 = vrot.slane %v1629, 2
        %v1680 = vrot.slane %v1630, 2
        %v1681 = vsel %vm482, %v1679, %v1680
        %v1682 = vrot.slane %v1631, 2
        %v1683 = vsel %vm482, %v1680, %v1682
        %v1684 = vrot.slane %v1632, 2
        %v1685 = vrot.slane %v1633, 2
        %v1686 = vsel %vm482, %v1684, %v1685
        %v1687 = vrot.slane %v1634, 2
        %v1688 = vsel %vm482, %v1685, %v1687
        %v1689 = vrot.slane %v1635, 2
        %v1690 = vrot.slane %v1636, 2
        %v1691 = vsel %vm482, %v1689, %v1690
        %v1692 = vrot.slane %v1637, 2
        %v1693 = vsel %vm482, %v1690, %v1692
        %v1694 = vrot.slane %v1638, 2
        %v1695 = vrot.slane %v1639, 2
        %v1696 = vsel %vm482, %v1694, %v1695
        %v1697 = vrot.slane %v1640, 2
        %v1698 = vsel %vm482, %v1695, %v1697
        %v1699 = vrot.slane %v1641, 2
        %v1700 = vrot.slane %v1642, 2
        %v1701 = vsel %vm482, %v1699, %v1700
        %v1702 = vrot.slane %v1643, 2
        %v1703 = vsel %vm482, %v1700, %v1702
        %v1704 = vrot.slane %v1644, 2
        %v1705 = vrot.slane %v1645, 2
        %v1706 = vsel %vm482, %v1704, %v1705
        %v1707 = vrot.slane %v1646, 2
        %v1708 = vsel %vm482, %v1705, %v1707
        %v1709 = vrot.slane %v1647, 2
        %v1710 = vrot.slane %v1648, 2
        %v1711 = vsel %vm482, %v1709, %v1710
        %v1712 = vrot.slane %v1649, 2
        %v1713 = vsel %vm482, %v1710, %v1712
        %v1730 = vadd.f32 %v1610, %v1676
        %v1731 = vadd.f32 %v1611, %v1678
        %v1732 = vadd.f32 %v1612, %v1681
        %v1733 = vadd.f32 %v1613, %v1683
        %v1734 = vadd.f32 %v1614, %v1686
        %v1735 = vadd.f32 %v1615, %v1688
        %v1736 = vadd.f32 %v1616, %v1691
        %v1737 = vadd.f32 %v1617, %v1693
        %v1738 = vadd.f32 %v1618, %v1696
        %v1739 = vadd.f32 %v1619, %v1698
        %v1740 = vadd.f32 %v1620, %v1701
        %v1741 = vadd.f32 %v1621, %v1703
        %v1742 = vadd.f32 %v1622, %v1706
        %v1743 = vadd.f32 %v1623, %v1708
        %v1744 = vadd.f32 %v1624, %v1711
        %v1745 = vadd.f32 %v1625, %v1713
        %s1746 = sadd.s32 %s224, 9
        %s1747 = smul.u32 %s1746, 3
        %s1748 = smul.addr %s1747, 4
        %s1749 = scalar_lea.vmem %s222, %s1748
        %v1750 = vld [vmem:[%s1749] sm:$0xf]
        %v1751 = vld [vmem:[%s1749 + $0x4] sm:$0xf]
        %v1752 = vld [vmem:[%s1749 + $0x8] sm:$0x1]
        %v1753 = vld [vmem:[%s1749 + $0xc] sm:$0xf]
        %v1754 = vld [vmem:[%s1749 + $0x10] sm:$0xf]
        %v1755 = vld [vmem:[%s1749 + $0x14] sm:$0x1]
        %v1756 = vld [vmem:[%s1749 + $0x18] sm:$0xf]
        %v1757 = vld [vmem:[%s1749 + $0x1c] sm:$0xf]
        %v1758 = vld [vmem:[%s1749 + $0x20] sm:$0x1]
        %v1759 = vld [vmem:[%s1749 + $0x24] sm:$0xf]
        %v1760 = vld [vmem:[%s1749 + $0x28] sm:$0xf]
        %v1761 = vld [vmem:[%s1749 + $0x2c] sm:$0x1]
        %v1762 = vld [vmem:[%s1749 + $0x30] sm:$0xf]
        %v1763 = vld [vmem:[%s1749 + $0x34] sm:$0xf]
        %v1764 = vld [vmem:[%s1749 + $0x38] sm:$0x1]
        %v1765 = vld [vmem:[%s1749 + $0x3c] sm:$0xf]
        %v1766 = vld [vmem:[%s1749 + $0x40] sm:$0xf]
        %v1767 = vld [vmem:[%s1749 + $0x44] sm:$0x1]
        %v1768 = vld [vmem:[%s1749 + $0x48] sm:$0xf]
        %v1769 = vld [vmem:[%s1749 + $0x4c] sm:$0xf]
        %v1770 = vld [vmem:[%s1749 + $0x50] sm:$0x1]
        %v1771 = vld [vmem:[%s1749 + $0x54] sm:$0xf]
        %v1772 = vld [vmem:[%s1749 + $0x58] sm:$0xf]
        %v1773 = vld [vmem:[%s1749 + $0x5c] sm:$0x1]
        %v1774 = vunpack.c.l.bf16 %v1750
        %v1775 = vunpack.c.l.bf16 %v1751
        %v1776 = vunpack.c.l.bf16 %v1752
        %v1777 = vunpack.c.l.bf16 %v1753
        %v1778 = vunpack.c.l.bf16 %v1754
        %v1779 = vunpack.c.l.bf16 %v1755
        %v1780 = vunpack.c.l.bf16 %v1756
        %v1781 = vunpack.c.l.bf16 %v1757
        %v1782 = vunpack.c.l.bf16 %v1758
        %v1783 = vunpack.c.l.bf16 %v1759
        %v1784 = vunpack.c.l.bf16 %v1760
        %v1785 = vunpack.c.l.bf16 %v1761
        %v1786 = vunpack.c.l.bf16 %v1762
        %v1787 = vunpack.c.l.bf16 %v1763
        %v1788 = vunpack.c.l.bf16 %v1764
        %v1789 = vunpack.c.l.bf16 %v1765
        %v1790 = vunpack.c.l.bf16 %v1766
        %v1791 = vunpack.c.l.bf16 %v1767
        %v1792 = vunpack.c.l.bf16 %v1768
        %v1793 = vunpack.c.l.bf16 %v1769
        %v1794 = vunpack.c.l.bf16 %v1770
        %v1795 = vunpack.c.l.bf16 %v1771
        %v1796 = vunpack.c.l.bf16 %v1772
        %v1797 = vunpack.c.l.bf16 %v1773
        %v1798 = vmul.f32 %v1774, %v607
        %v1799 = vmul.f32 %v1775, %v607
        %v1800 = vmul.f32 %v1777, %v607
        %v1801 = vmul.f32 %v1778, %v607
        %v1802 = vmul.f32 %v1780, %v607
        %v1803 = vmul.f32 %v1781, %v607
        %v1804 = vmul.f32 %v1783, %v607
        %v1805 = vmul.f32 %v1784, %v607
        %v1806 = vmul.f32 %v1786, %v607
        %v1807 = vmul.f32 %v1787, %v607
        %v1808 = vmul.f32 %v1789, %v607
        %v1809 = vmul.f32 %v1790, %v607
        %v1810 = vmul.f32 %v1792, %v607
        %v1811 = vmul.f32 %v1793, %v607
        %v1812 = vmul.f32 %v1795, %v607
        %v1813 = vmul.f32 %v1796, %v607
        %v1814 = vadd.f32 %v1730, %v1798
        %v1815 = vadd.f32 %v1731, %v1799
        %v1816 = vadd.f32 %v1732, %v1800
        %v1817 = vadd.f32 %v1733, %v1801
        %v1818 = vadd.f32 %v1734, %v1802
        %v1819 = vadd.f32 %v1735, %v1803
        %v1820 = vadd.f32 %v1736, %v1804
        %v1821 = vadd.f32 %v1737, %v1805
        %v1822 = vadd.f32 %v1738, %v1806
        %v1823 = vadd.f32 %v1739, %v1807
        %v1824 = vadd.f32 %v1740, %v1808
        %v1825 = vadd.f32 %v1741, %v1809
        %v1826 = vadd.f32 %v1742, %v1810
        %v1827 = vadd.f32 %v1743, %v1811
        %v1828 = vadd.f32 %v1744, %v1812
        %v1829 = vadd.f32 %v1745, %v1813
        %v1830 = vmul.f32 %v1774, %v640
        %v1831 = vmul.f32 %v1775, %v640
        %v1832 = vmul.f32 %v1776, %v640
        %v1833 = vmul.f32 %v1777, %v640
        %v1834 = vmul.f32 %v1778, %v640
        %v1835 = vmul.f32 %v1779, %v640
        %v1836 = vmul.f32 %v1780, %v640
        %v1837 = vmul.f32 %v1781, %v640
        %v1838 = vmul.f32 %v1782, %v640
        %v1839 = vmul.f32 %v1783, %v640
        %v1840 = vmul.f32 %v1784, %v640
        %v1841 = vmul.f32 %v1785, %v640
        %v1842 = vmul.f32 %v1786, %v640
        %v1843 = vmul.f32 %v1787, %v640
        %v1844 = vmul.f32 %v1788, %v640
        %v1845 = vmul.f32 %v1789, %v640
        %v1846 = vmul.f32 %v1790, %v640
        %v1847 = vmul.f32 %v1791, %v640
        %v1848 = vmul.f32 %v1792, %v640
        %v1849 = vmul.f32 %v1793, %v640
        %v1850 = vmul.f32 %v1794, %v640
        %v1851 = vmul.f32 %v1795, %v640
        %v1852 = vmul.f32 %v1796, %v640
        %v1853 = vmul.f32 %v1797, %v640
        %v1878 = vrot.slane %v1830, 1
        %v1879 = vrot.slane %v1831, 1
        %v1880 = vsel %vm360, %v1878, %v1879
        %v1881 = vrot.slane %v1832, 1
        %v1882 = vsel %vm360, %v1879, %v1881
        %v1883 = vrot.slane %v1833, 1
        %v1884 = vrot.slane %v1834, 1
        %v1885 = vsel %vm360, %v1883, %v1884
        %v1886 = vrot.slane %v1835, 1
        %v1887 = vsel %vm360, %v1884, %v1886
        %v1888 = vrot.slane %v1836, 1
        %v1889 = vrot.slane %v1837, 1
        %v1890 = vsel %vm360, %v1888, %v1889
        %v1891 = vrot.slane %v1838, 1
        %v1892 = vsel %vm360, %v1889, %v1891
        %v1893 = vrot.slane %v1839, 1
        %v1894 = vrot.slane %v1840, 1
        %v1895 = vsel %vm360, %v1893, %v1894
        %v1896 = vrot.slane %v1841, 1
        %v1897 = vsel %vm360, %v1894, %v1896
        %v1898 = vrot.slane %v1842, 1
        %v1899 = vrot.slane %v1843, 1
        %v1900 = vsel %vm360, %v1898, %v1899
        %v1901 = vrot.slane %v1844, 1
        %v1902 = vsel %vm360, %v1899, %v1901
        %v1903 = vrot.slane %v1845, 1
        %v1904 = vrot.slane %v1846, 1
        %v1905 = vsel %vm360, %v1903, %v1904
        %v1906 = vrot.slane %v1847, 1
        %v1907 = vsel %vm360, %v1904, %v1906
        %v1908 = vrot.slane %v1848, 1
        %v1909 = vrot.slane %v1849, 1
        %v1910 = vsel %vm360, %v1908, %v1909
        %v1911 = vrot.slane %v1850, 1
        %v1912 = vsel %vm360, %v1909, %v1911
        %v1913 = vrot.slane %v1851, 1
        %v1914 = vrot.slane %v1852, 1
        %v1915 = vsel %vm360, %v1913, %v1914
        %v1916 = vrot.slane %v1853, 1
        %v1917 = vsel %vm360, %v1914, %v1916
        %v1934 = vadd.f32 %v1814, %v1880
        %v1935 = vadd.f32 %v1815, %v1882
        %v1936 = vadd.f32 %v1816, %v1885
        %v1937 = vadd.f32 %v1817, %v1887
        %v1938 = vadd.f32 %v1818, %v1890
        %v1939 = vadd.f32 %v1819, %v1892
        %v1940 = vadd.f32 %v1820, %v1895
        %v1941 = vadd.f32 %v1821, %v1897
        %v1942 = vadd.f32 %v1822, %v1900
        %v1943 = vadd.f32 %v1823, %v1902
        %v1944 = vadd.f32 %v1824, %v1905
        %v1945 = vadd.f32 %v1825, %v1907
        %v1946 = vadd.f32 %v1826, %v1910
        %v1947 = vadd.f32 %v1827, %v1912
        %v1948 = vadd.f32 %v1828, %v1915
        %v1949 = vadd.f32 %v1829, %v1917
        %v1950 = vmul.f32 %v1774, %v761
        %v1951 = vmul.f32 %v1775, %v761
        %v1952 = vmul.f32 %v1776, %v761
        %v1953 = vmul.f32 %v1777, %v761
        %v1954 = vmul.f32 %v1778, %v761
        %v1955 = vmul.f32 %v1779, %v761
        %v1956 = vmul.f32 %v1780, %v761
        %v1957 = vmul.f32 %v1781, %v761
        %v1958 = vmul.f32 %v1782, %v761
        %v1959 = vmul.f32 %v1783, %v761
        %v1960 = vmul.f32 %v1784, %v761
        %v1961 = vmul.f32 %v1785, %v761
        %v1962 = vmul.f32 %v1786, %v761
        %v1963 = vmul.f32 %v1787, %v761
        %v1964 = vmul.f32 %v1788, %v761
        %v1965 = vmul.f32 %v1789, %v761
        %v1966 = vmul.f32 %v1790, %v761
        %v1967 = vmul.f32 %v1791, %v761
        %v1968 = vmul.f32 %v1792, %v761
        %v1969 = vmul.f32 %v1793, %v761
        %v1970 = vmul.f32 %v1794, %v761
        %v1971 = vmul.f32 %v1795, %v761
        %v1972 = vmul.f32 %v1796, %v761
        %v1973 = vmul.f32 %v1797, %v761
        %v1998 = vrot.slane %v1950, 2
        %v1999 = vrot.slane %v1951, 2
        %v2000 = vsel %vm482, %v1998, %v1999
        %v2001 = vrot.slane %v1952, 2
        %v2002 = vsel %vm482, %v1999, %v2001
        %v2003 = vrot.slane %v1953, 2
        %v2004 = vrot.slane %v1954, 2
        %v2005 = vsel %vm482, %v2003, %v2004
        %v2006 = vrot.slane %v1955, 2
        %v2007 = vsel %vm482, %v2004, %v2006
        %v2008 = vrot.slane %v1956, 2
        %v2009 = vrot.slane %v1957, 2
        %v2010 = vsel %vm482, %v2008, %v2009
        %v2011 = vrot.slane %v1958, 2
        %v2012 = vsel %vm482, %v2009, %v2011
        %v2013 = vrot.slane %v1959, 2
        %v2014 = vrot.slane %v1960, 2
        %v2015 = vsel %vm482, %v2013, %v2014
        %v2016 = vrot.slane %v1961, 2
        %v2017 = vsel %vm482, %v2014, %v2016
        %v2018 = vrot.slane %v1962, 2
        %v2019 = vrot.slane %v1963, 2
        %v2020 = vsel %vm482, %v2018, %v2019
        %v2021 = vrot.slane %v1964, 2
        %v2022 = vsel %vm482, %v2019, %v2021
        %v2023 = vrot.slane %v1965, 2
        %v2024 = vrot.slane %v1966, 2
        %v2025 = vsel %vm482, %v2023, %v2024
        %v2026 = vrot.slane %v1967, 2
        %v2027 = vsel %vm482, %v2024, %v2026
        %v2028 = vrot.slane %v1968, 2
        %v2029 = vrot.slane %v1969, 2
        %v2030 = vsel %vm482, %v2028, %v2029
        %v2031 = vrot.slane %v1970, 2
        %v2032 = vsel %vm482, %v2029, %v2031
        %v2033 = vrot.slane %v1971, 2
        %v2034 = vrot.slane %v1972, 2
        %v2035 = vsel %vm482, %v2033, %v2034
        %v2036 = vrot.slane %v1973, 2
        %v2037 = vsel %vm482, %v2034, %v2036
        %v2054 = vadd.f32 %v1934, %v2000
        %v2055 = vadd.f32 %v1935, %v2002
        %v2056 = vadd.f32 %v1936, %v2005
        %v2057 = vadd.f32 %v1937, %v2007
        %v2058 = vadd.f32 %v1938, %v2010
        %v2059 = vadd.f32 %v1939, %v2012
        %v2060 = vadd.f32 %v1940, %v2015
        %v2061 = vadd.f32 %v1941, %v2017
        %v2062 = vadd.f32 %v1942, %v2020
        %v2063 = vadd.f32 %v1943, %v2022
        %v2064 = vadd.f32 %v1944, %v2025
        %v2065 = vadd.f32 %v1945, %v2027
        %v2066 = vadd.f32 %v1946, %v2030
        %v2067 = vadd.f32 %v1947, %v2032
        %v2068 = vadd.f32 %v1948, %v2035
        %v2069 = vadd.f32 %v1949, %v2037
        %s2070 = sadd.s32 %s224, 10
        %s2071 = smul.u32 %s2070, 3
        %s2072 = smul.addr %s2071, 4
        %s2073 = scalar_lea.vmem %s222, %s2072
        %v2074 = vld [vmem:[%s2073] sm:$0xf]
        %v2075 = vld [vmem:[%s2073 + $0x4] sm:$0xf]
        %v2076 = vld [vmem:[%s2073 + $0x8] sm:$0x1]
        %v2077 = vld [vmem:[%s2073 + $0xc] sm:$0xf]
        %v2078 = vld [vmem:[%s2073 + $0x10] sm:$0xf]
        %v2079 = vld [vmem:[%s2073 + $0x14] sm:$0x1]
        %v2080 = vld [vmem:[%s2073 + $0x18] sm:$0xf]
        %v2081 = vld [vmem:[%s2073 + $0x1c] sm:$0xf]
        %v2082 = vld [vmem:[%s2073 + $0x20] sm:$0x1]
        %v2083 = vld [vmem:[%s2073 + $0x24] sm:$0xf]
        %v2084 = vld [vmem:[%s2073 + $0x28] sm:$0xf]
        %v2085 = vld [vmem:[%s2073 + $0x2c] sm:$0x1]
        %v2086 = vld [vmem:[%s2073 + $0x30] sm:$0xf]
        %v2087 = vld [vmem:[%s2073 + $0x34] sm:$0xf]
        %v2088 = vld [vmem:[%s2073 + $0x38] sm:$0x1]
        %v2089 = vld [vmem:[%s2073 + $0x3c] sm:$0xf]
        %v2090 = vld [vmem:[%s2073 + $0x40] sm:$0xf]
        %v2091 = vld [vmem:[%s2073 + $0x44] sm:$0x1]
        %v2092 = vld [vmem:[%s2073 + $0x48] sm:$0xf]
        %v2093 = vld [vmem:[%s2073 + $0x4c] sm:$0xf]
        %v2094 = vld [vmem:[%s2073 + $0x50] sm:$0x1]
        %v2095 = vld [vmem:[%s2073 + $0x54] sm:$0xf]
        %v2096 = vld [vmem:[%s2073 + $0x58] sm:$0xf]
        %v2097 = vld [vmem:[%s2073 + $0x5c] sm:$0x1]
        %v2098 = vunpack.c.l.bf16 %v2074
        %v2099 = vunpack.c.l.bf16 %v2075
        %v2100 = vunpack.c.l.bf16 %v2076
        %v2101 = vunpack.c.l.bf16 %v2077
        %v2102 = vunpack.c.l.bf16 %v2078
        %v2103 = vunpack.c.l.bf16 %v2079
        %v2104 = vunpack.c.l.bf16 %v2080
        %v2105 = vunpack.c.l.bf16 %v2081
        %v2106 = vunpack.c.l.bf16 %v2082
        %v2107 = vunpack.c.l.bf16 %v2083
        %v2108 = vunpack.c.l.bf16 %v2084
        %v2109 = vunpack.c.l.bf16 %v2085
        %v2110 = vunpack.c.l.bf16 %v2086
        %v2111 = vunpack.c.l.bf16 %v2087
        %v2112 = vunpack.c.l.bf16 %v2088
        %v2113 = vunpack.c.l.bf16 %v2089
        %v2114 = vunpack.c.l.bf16 %v2090
        %v2115 = vunpack.c.l.bf16 %v2091
        %v2116 = vunpack.c.l.bf16 %v2092
        %v2117 = vunpack.c.l.bf16 %v2093
        %v2118 = vunpack.c.l.bf16 %v2094
        %v2119 = vunpack.c.l.bf16 %v2095
        %v2120 = vunpack.c.l.bf16 %v2096
        %v2121 = vunpack.c.l.bf16 %v2097
        %v2122 = vmul.f32 %v2098, %v934
        %v2123 = vmul.f32 %v2099, %v934
        %v2124 = vmul.f32 %v2101, %v934
        %v2125 = vmul.f32 %v2102, %v934
        %v2126 = vmul.f32 %v2104, %v934
        %v2127 = vmul.f32 %v2105, %v934
        %v2128 = vmul.f32 %v2107, %v934
        %v2129 = vmul.f32 %v2108, %v934
        %v2130 = vmul.f32 %v2110, %v934
        %v2131 = vmul.f32 %v2111, %v934
        %v2132 = vmul.f32 %v2113, %v934
        %v2133 = vmul.f32 %v2114, %v934
        %v2134 = vmul.f32 %v2116, %v934
        %v2135 = vmul.f32 %v2117, %v934
        %v2136 = vmul.f32 %v2119, %v934
        %v2137 = vmul.f32 %v2120, %v934
        %v2138 = vadd.f32 %v2054, %v2122
        %v2139 = vadd.f32 %v2055, %v2123
        %v2140 = vadd.f32 %v2056, %v2124
        %v2141 = vadd.f32 %v2057, %v2125
        %v2142 = vadd.f32 %v2058, %v2126
        %v2143 = vadd.f32 %v2059, %v2127
        %v2144 = vadd.f32 %v2060, %v2128
        %v2145 = vadd.f32 %v2061, %v2129
        %v2146 = vadd.f32 %v2062, %v2130
        %v2147 = vadd.f32 %v2063, %v2131
        %v2148 = vadd.f32 %v2064, %v2132
        %v2149 = vadd.f32 %v2065, %v2133
        %v2150 = vadd.f32 %v2066, %v2134
        %v2151 = vadd.f32 %v2067, %v2135
        %v2152 = vadd.f32 %v2068, %v2136
        %v2153 = vadd.f32 %v2069, %v2137
        %v2154 = vmul.f32 %v2098, %v967
        %v2155 = vmul.f32 %v2099, %v967
        %v2156 = vmul.f32 %v2100, %v967
        %v2157 = vmul.f32 %v2101, %v967
        %v2158 = vmul.f32 %v2102, %v967
        %v2159 = vmul.f32 %v2103, %v967
        %v2160 = vmul.f32 %v2104, %v967
        %v2161 = vmul.f32 %v2105, %v967
        %v2162 = vmul.f32 %v2106, %v967
        %v2163 = vmul.f32 %v2107, %v967
        %v2164 = vmul.f32 %v2108, %v967
        %v2165 = vmul.f32 %v2109, %v967
        %v2166 = vmul.f32 %v2110, %v967
        %v2167 = vmul.f32 %v2111, %v967
        %v2168 = vmul.f32 %v2112, %v967
        %v2169 = vmul.f32 %v2113, %v967
        %v2170 = vmul.f32 %v2114, %v967
        %v2171 = vmul.f32 %v2115, %v967
        %v2172 = vmul.f32 %v2116, %v967
        %v2173 = vmul.f32 %v2117, %v967
        %v2174 = vmul.f32 %v2118, %v967
        %v2175 = vmul.f32 %v2119, %v967
        %v2176 = vmul.f32 %v2120, %v967
        %v2177 = vmul.f32 %v2121, %v967
        %v2202 = vrot.slane %v2154, 1
        %v2203 = vrot.slane %v2155, 1
        %v2204 = vsel %vm360, %v2202, %v2203
        %v2205 = vrot.slane %v2156, 1
        %v2206 = vsel %vm360, %v2203, %v2205
        %v2207 = vrot.slane %v2157, 1
        %v2208 = vrot.slane %v2158, 1
        %v2209 = vsel %vm360, %v2207, %v2208
        %v2210 = vrot.slane %v2159, 1
        %v2211 = vsel %vm360, %v2208, %v2210
        %v2212 = vrot.slane %v2160, 1
        %v2213 = vrot.slane %v2161, 1
        %v2214 = vsel %vm360, %v2212, %v2213
        %v2215 = vrot.slane %v2162, 1
        %v2216 = vsel %vm360, %v2213, %v2215
        %v2217 = vrot.slane %v2163, 1
        %v2218 = vrot.slane %v2164, 1
        %v2219 = vsel %vm360, %v2217, %v2218
        %v2220 = vrot.slane %v2165, 1
        %v2221 = vsel %vm360, %v2218, %v2220
        %v2222 = vrot.slane %v2166, 1
        %v2223 = vrot.slane %v2167, 1
        %v2224 = vsel %vm360, %v2222, %v2223
        %v2225 = vrot.slane %v2168, 1
        %v2226 = vsel %vm360, %v2223, %v2225
        %v2227 = vrot.slane %v2169, 1
        %v2228 = vrot.slane %v2170, 1
        %v2229 = vsel %vm360, %v2227, %v2228
        %v2230 = vrot.slane %v2171, 1
        %v2231 = vsel %vm360, %v2228, %v2230
        %v2232 = vrot.slane %v2172, 1
        %v2233 = vrot.slane %v2173, 1
        %v2234 = vsel %vm360, %v2232, %v2233
        %v2235 = vrot.slane %v2174, 1
        %v2236 = vsel %vm360, %v2233, %v2235
        %v2237 = vrot.slane %v2175, 1
        %v2238 = vrot.slane %v2176, 1
        %v2239 = vsel %vm360, %v2237, %v2238
        %v2240 = vrot.slane %v2177, 1
        %v2241 = vsel %vm360, %v2238, %v2240
        %v2258 = vadd.f32 %v2138, %v2204
        %v2259 = vadd.f32 %v2139, %v2206
        %v2260 = vadd.f32 %v2140, %v2209
        %v2261 = vadd.f32 %v2141, %v2211
        %v2262 = vadd.f32 %v2142, %v2214
        %v2263 = vadd.f32 %v2143, %v2216
        %v2264 = vadd.f32 %v2144, %v2219
        %v2265 = vadd.f32 %v2145, %v2221
        %v2266 = vadd.f32 %v2146, %v2224
        %v2267 = vadd.f32 %v2147, %v2226
        %v2268 = vadd.f32 %v2148, %v2229
        %v2269 = vadd.f32 %v2149, %v2231
        %v2270 = vadd.f32 %v2150, %v2234
        %v2271 = vadd.f32 %v2151, %v2236
        %v2272 = vadd.f32 %v2152, %v2239
        %v2273 = vadd.f32 %v2153, %v2241
        %v2274 = vmul.f32 %v2098, %v1088
        %v2275 = vmul.f32 %v2099, %v1088
        %v2276 = vmul.f32 %v2100, %v1088
        %v2277 = vmul.f32 %v2101, %v1088
        %v2278 = vmul.f32 %v2102, %v1088
        %v2279 = vmul.f32 %v2103, %v1088
        %v2280 = vmul.f32 %v2104, %v1088
        %v2281 = vmul.f32 %v2105, %v1088
        %v2282 = vmul.f32 %v2106, %v1088
        %v2283 = vmul.f32 %v2107, %v1088
        %v2284 = vmul.f32 %v2108, %v1088
        %v2285 = vmul.f32 %v2109, %v1088
        %v2286 = vmul.f32 %v2110, %v1088
        %v2287 = vmul.f32 %v2111, %v1088
        %v2288 = vmul.f32 %v2112, %v1088
        %v2289 = vmul.f32 %v2113, %v1088
        %v2290 = vmul.f32 %v2114, %v1088
        %v2291 = vmul.f32 %v2115, %v1088
        %v2292 = vmul.f32 %v2116, %v1088
        %v2293 = vmul.f32 %v2117, %v1088
        %v2294 = vmul.f32 %v2118, %v1088
        %v2295 = vmul.f32 %v2119, %v1088
        %v2296 = vmul.f32 %v2120, %v1088
        %v2297 = vmul.f32 %v2121, %v1088
        %v2322 = vrot.slane %v2274, 2
        %v2323 = vrot.slane %v2275, 2
        %v2324 = vsel %vm482, %v2322, %v2323
        %v2325 = vrot.slane %v2276, 2
        %v2326 = vsel %vm482, %v2323, %v2325
        %v2327 = vrot.slane %v2277, 2
        %v2328 = vrot.slane %v2278, 2
        %v2329 = vsel %vm482, %v2327, %v2328
        %v2330 = vrot.slane %v2279, 2
        %v2331 = vsel %vm482, %v2328, %v2330
        %v2332 = vrot.slane %v2280, 2
        %v2333 = vrot.slane %v2281, 2
        %v2334 = vsel %vm482, %v2332, %v2333
        %v2335 = vrot.slane %v2282, 2
        %v2336 = vsel %vm482, %v2333, %v2335
        %v2337 = vrot.slane %v2283, 2
        %v2338 = vrot.slane %v2284, 2
        %v2339 = vsel %vm482, %v2337, %v2338
        %v2340 = vrot.slane %v2285, 2
        %v2341 = vsel %vm482, %v2338, %v2340
        %v2342 = vrot.slane %v2286, 2
        %v2343 = vrot.slane %v2287, 2
        %v2344 = vsel %vm482, %v2342, %v2343
        %v2345 = vrot.slane %v2288, 2
        %v2346 = vsel %vm482, %v2343, %v2345
        %v2347 = vrot.slane %v2289, 2
        %v2348 = vrot.slane %v2290, 2
        %v2349 = vsel %vm482, %v2347, %v2348
        %v2350 = vrot.slane %v2291, 2
        %v2351 = vsel %vm482, %v2348, %v2350
        %v2352 = vrot.slane %v2292, 2
        %v2353 = vrot.slane %v2293, 2
        %v2354 = vsel %vm482, %v2352, %v2353
        %v2355 = vrot.slane %v2294, 2
        %v2356 = vsel %vm482, %v2353, %v2355
        %v2357 = vrot.slane %v2295, 2
        %v2358 = vrot.slane %v2296, 2
        %v2359 = vsel %vm482, %v2357, %v2358
        %v2360 = vrot.slane %v2297, 2
        %v2361 = vsel %vm482, %v2358, %v2360
        %v2378 = vadd.f32 %v2258, %v2324
        %v2379 = vadd.f32 %v2259, %v2326
        %v2380 = vadd.f32 %v2260, %v2329
        %v2381 = vadd.f32 %v2261, %v2331
        %v2382 = vadd.f32 %v2262, %v2334
        %v2383 = vadd.f32 %v2263, %v2336
        %v2384 = vadd.f32 %v2264, %v2339
        %v2385 = vadd.f32 %v2265, %v2341
        %v2386 = vadd.f32 %v2266, %v2344
        %v2387 = vadd.f32 %v2267, %v2346
        %v2388 = vadd.f32 %v2268, %v2349
        %v2389 = vadd.f32 %v2269, %v2351
        %v2390 = vadd.f32 %v2270, %v2354
        %v2391 = vadd.f32 %v2271, %v2356
        %v2392 = vadd.f32 %v2272, %v2359
        %v2393 = vadd.f32 %v2273, %v2361
        %v2394 = vpack.c.bf16 %v2379, %v2378
        %v2395 = vpack.c.bf16 %v2381, %v2380
        %v2396 = vpack.c.bf16 %v2383, %v2382
        %v2397 = vpack.c.bf16 %v2385, %v2384
        %v2398 = vpack.c.bf16 %v2387, %v2386
        %v2399 = vpack.c.bf16 %v2389, %v2388
        %v2400 = vpack.c.bf16 %v2391, %v2390
        %v2401 = vpack.c.bf16 %v2393, %v2392
        %v2402 = vld [vmem:[%s2] sm:$0xf]
        %v2403 = vld [vmem:[%s2 + $0x4] sm:$0xf]
        %v2404 = vld [vmem:[%s2 + $0x8] sm:$0xf]
        %v2405 = vld [vmem:[%s2 + $0xc] sm:$0xf]
        %v2406 = vld [vmem:[%s2 + $0x10] sm:$0xf]
        %v2407 = vld [vmem:[%s2 + $0x14] sm:$0xf]
        %v2408 = vld [vmem:[%s2 + $0x18] sm:$0xf]
        %v2409 = vld [vmem:[%s2 + $0x1c] sm:$0xf]
        %v2410 = vld [vmem:[%s2 + $0x20] sm:$0xf]
        %v2411 = vld [vmem:[%s2 + $0x24] sm:$0xf]
        %v2412 = vld [vmem:[%s2 + $0x28] sm:$0xf]
        %v2413 = vld [vmem:[%s2 + $0x2c] sm:$0xf]
        %v2414 = vld [vmem:[%s2 + $0x30] sm:$0xf]
        %v2415 = vld [vmem:[%s2 + $0x34] sm:$0xf]
        %v2416 = vld [vmem:[%s2 + $0x38] sm:$0xf]
        %v2417 = vld [vmem:[%s2 + $0x3c] sm:$0xf]
        %v2434 = vunpack.c.l.b16 %v2402
        %v2435 = vunpack.c.l.b16 %v2403
        %v2436 = vunpack.c.l.b16 %v2404
        %v2437 = vunpack.c.l.b16 %v2405
        %v2438 = vunpack.c.l.b16 %v2406
        %v2439 = vunpack.c.l.b16 %v2407
        %v2440 = vunpack.c.l.b16 %v2408
        %v2441 = vunpack.c.l.b16 %v2409
        %v2442 = vunpack.c.l.b16 %v2410
        %v2443 = vunpack.c.l.b16 %v2411
        %v2444 = vunpack.c.l.b16 %v2412
        %v2445 = vunpack.c.l.b16 %v2413
        %v2446 = vunpack.c.l.b16 %v2414
        %v2447 = vunpack.c.l.b16 %v2415
        %v2448 = vunpack.c.l.b16 %v2416
        %v2449 = vunpack.c.l.b16 %v2417
        %v2450 = vpack.c.b16 %v2435, %v2434
        %v2451 = vpack.c.b16 %v2437, %v2436
        %v2452 = vpack.c.b16 %v2439, %v2438
        %v2453 = vpack.c.b16 %v2441, %v2440
        %v2454 = vpack.c.b16 %v2443, %v2442
        %v2455 = vpack.c.b16 %v2445, %v2444
        %v2456 = vpack.c.b16 %v2447, %v2446
        %v2457 = vpack.c.b16 %v2449, %v2448
        %2466 = vmatpush.bf16.msra.mxu0 %v2457
        %2467 = vmatpush.bf16.msra.mxu0 %v2456
        %2468 = vmatpush.bf16.msra.mxu0 %v2455
        %2469 = vmatpush.bf16.msra.mxu0 %v2454
        %2470 = vmatpush.bf16.msra.mxu0 %v2453
        %2471 = vmatpush.bf16.msra.mxu0 %v2452
        %2472 = vmatpush.bf16.msra.mxu0 %v2451
        %2473 = vmatpush.bf16.msra.mxu0 %v2450
        %2474 = vmatmul.bf16.gmra.mxu0 %v2394
        %v2475 = vpop.f32.mrf.mxu0
        %v2476 = vadd.f32 0.0, %v2475
        %v2477 = vpop.f32.mrf.mxu0
        %v2478 = vadd.f32 0.0, %v2477
        %2479 = vmatmul.bf16.gmra.mxu0 %v2395
        %v2480 = vpop.f32.mrf.mxu0
        %v2481 = vadd.f32 0.0, %v2480
        %v2482 = vpop.f32.mrf.mxu0
        %v2483 = vadd.f32 0.0, %v2482
        %2484 = vmatmul.bf16.gmra.mxu0 %v2396
        %v2485 = vpop.f32.mrf.mxu0
        %v2486 = vadd.f32 0.0, %v2485
        %v2487 = vpop.f32.mrf.mxu0
        %v2488 = vadd.f32 0.0, %v2487
        %2489 = vmatmul.bf16.gmra.mxu0 %v2397
        %v2490 = vpop.f32.mrf.mxu0
        %v2491 = vadd.f32 0.0, %v2490
        %v2492 = vpop.f32.mrf.mxu0
        %v2493 = vadd.f32 0.0, %v2492
        %2494 = vmatmul.bf16.gmra.mxu0 %v2398
        %v2495 = vpop.f32.mrf.mxu0
        %v2496 = vadd.f32 0.0, %v2495
        %v2497 = vpop.f32.mrf.mxu0
        %v2498 = vadd.f32 0.0, %v2497
        %2499 = vmatmul.bf16.gmra.mxu0 %v2399
        %v2500 = vpop.f32.mrf.mxu0
        %v2501 = vadd.f32 0.0, %v2500
        %v2502 = vpop.f32.mrf.mxu0
        %v2503 = vadd.f32 0.0, %v2502
        %2504 = vmatmul.bf16.gmra.mxu0 %v2400
        %v2505 = vpop.f32.mrf.mxu0
        %v2506 = vadd.f32 0.0, %v2505
        %v2507 = vpop.f32.mrf.mxu0
        %v2508 = vadd.f32 0.0, %v2507
        %2509 = vmatmul.bf16.gmra.mxu0 %v2401
        %v2510 = vpop.f32.mrf.mxu0
        %v2511 = vadd.f32 0.0, %v2510
        %v2512 = vpop.f32.mrf.mxu0
        %v2513 = vadd.f32 0.0, %v2512
        %2514 = vdwg.mxu0
        %v2515 = vadd.f32 %v2476, %v2478
        %v2516 = vadd.f32 %v2515, %v2481
        %v2517 = vadd.f32 %v2516, %v2483
        %v2518 = vadd.f32 %v2517, %v2486
        %v2519 = vadd.f32 %v2518, %v2488
        %v2520 = vadd.f32 %v2519, %v2491
        %v2521 = vadd.f32 %v2520, %v2493
        %v2522 = vadd.f32 %v2521, %v2496
        %v2523 = vadd.f32 %v2522, %v2498
        %v2524 = vadd.f32 %v2523, %v2501
        %v2525 = vadd.f32 %v2524, %v2503
        %v2526 = vadd.f32 %v2525, %v2506
        %v2527 = vadd.f32 %v2526, %v2508
        %v2528 = vadd.f32 %v2527, %v2511
        %v2529 = vadd.f32 %v2528, %v2513
        %v2530 = vrot.slane %v2529, 4
        %v2531 = vadd.f32 %v2529, %v2530
        %v2532 = vrot.slane %v2531, 2
        %v2533 = vadd.f32 %v2531, %v2532
        %v2534 = vrot.slane %v2533, 1
        %v2535 = vadd.f32 %v2533, %v2534
        %v2536 = vadd.f32 %v1351, %v2535
        %v2537 = vmul.f32 %v2476, %v2476
        %v2538 = vmul.f32 %v2478, %v2478
        %v2539 = vmul.f32 %v2481, %v2481
        %v2540 = vmul.f32 %v2483, %v2483
        %v2541 = vmul.f32 %v2486, %v2486
        %v2542 = vmul.f32 %v2488, %v2488
        %v2543 = vmul.f32 %v2491, %v2491
        %v2544 = vmul.f32 %v2493, %v2493
        %v2545 = vmul.f32 %v2496, %v2496
        %v2546 = vmul.f32 %v2498, %v2498
        %v2547 = vmul.f32 %v2501, %v2501
        %v2548 = vmul.f32 %v2503, %v2503
        %v2549 = vmul.f32 %v2506, %v2506
        %v2550 = vmul.f32 %v2508, %v2508
        %v2551 = vmul.f32 %v2511, %v2511
        %v2552 = vmul.f32 %v2513, %v2513
        %v2553 = vadd.f32 %v2537, %v2538
        %v2554 = vadd.f32 %v2553, %v2539
        %v2555 = vadd.f32 %v2554, %v2540
        %v2556 = vadd.f32 %v2555, %v2541
        %v2557 = vadd.f32 %v2556, %v2542
        %v2558 = vadd.f32 %v2557, %v2543
        %v2559 = vadd.f32 %v2558, %v2544
        %v2560 = vadd.f32 %v2559, %v2545
        %v2561 = vadd.f32 %v2560, %v2546
        %v2562 = vadd.f32 %v2561, %v2547
        %v2563 = vadd.f32 %v2562, %v2548
        %v2564 = vadd.f32 %v2563, %v2549
        %v2565 = vadd.f32 %v2564, %v2550
        %v2566 = vadd.f32 %v2565, %v2551
        %v2567 = vadd.f32 %v2566, %v2552
        %v2568 = vrot.slane %v2567, 4
        %v2569 = vadd.f32 %v2567, %v2568
        %v2570 = vrot.slane %v2569, 2
        %v2571 = vadd.f32 %v2569, %v2570
        %v2572 = vrot.slane %v2571, 1
        %v2573 = vadd.f32 %v2571, %v2572
        %v2574 = vadd.f32 %v1389, %v2573
        %v2575 = vpack.c.bf16 %v2476, %v2476
        %v2576 = vpack.c.bf16 %v2478, %v2478
        %v2577 = vpack.c.bf16 %v2481, %v2481
        %v2578 = vpack.c.bf16 %v2483, %v2483
        %v2579 = vpack.c.bf16 %v2486, %v2486
        %v2580 = vpack.c.bf16 %v2488, %v2488
        %v2581 = vpack.c.bf16 %v2491, %v2491
        %v2582 = vpack.c.bf16 %v2493, %v2493
        %v2583 = vpack.c.bf16 %v2496, %v2496
        %v2584 = vpack.c.bf16 %v2498, %v2498
        %v2585 = vpack.c.bf16 %v2501, %v2501
        %v2586 = vpack.c.bf16 %v2503, %v2503
        %v2587 = vpack.c.bf16 %v2506, %v2506
        %v2588 = vpack.c.bf16 %v2508, %v2508
        %v2589 = vpack.c.bf16 %v2511, %v2511
        %v2590 = vpack.c.bf16 %v2513, %v2513
        %s2591 = scalar_lea.vmem %s210, 64 [#allocation2]
        %2592 = vst [vmem:[%s2591] sm:$0xf] %v2575
        %2593 = vst [vmem:[%s2591 + $0x4] sm:$0xf] %v2576
        %2594 = vst [vmem:[%s2591 + $0x8] sm:$0xf] %v2577
        %2595 = vst [vmem:[%s2591 + $0xc] sm:$0xf] %v2578
        %2596 = vst [vmem:[%s2591 + $0x10] sm:$0xf] %v2579
        %2597 = vst [vmem:[%s2591 + $0x14] sm:$0xf] %v2580
        %2598 = vst [vmem:[%s2591 + $0x18] sm:$0xf] %v2581
        %2599 = vst [vmem:[%s2591 + $0x1c] sm:$0xf] %v2582
        %2600 = vst [vmem:[%s2591 + $0x20] sm:$0xf] %v2583
        %2601 = vst [vmem:[%s2591 + $0x24] sm:$0xf] %v2584
        %2602 = vst [vmem:[%s2591 + $0x28] sm:$0xf] %v2585
        %2603 = vst [vmem:[%s2591 + $0x2c] sm:$0xf] %v2586
        %2604 = vst [vmem:[%s2591 + $0x30] sm:$0xf] %v2587
        %2605 = vst [vmem:[%s2591 + $0x34] sm:$0xf] %v2588
        %2606 = vst [vmem:[%s2591 + $0x38] sm:$0xf] %v2589
        %2607 = vst [vmem:[%s2591 + $0x3c] sm:$0xf] %v2590
        %vm2608 = vcmask 1040384
        %v2609 = vsel %vm2608, %v2536, %v2574
        %2610 = vst [vmem:[%s217] sm:$0x3] %v2609
        %s2611 = sand.u32 %s112, 1
        %s2612 = scalar_lea.sflag [#allocation3], %s2611
        %s2613 = sand.u32 %s112, 1
        %s2614 = smul.addr %s2613, 128
        %s2615 = scalar_lea.vmem [#allocation2], %s2614
        %s2616 = sand.u32 %s140, 1
        %s2617 = scalar_lea.sflag [#allocation5], %s2616
        %s2618 = sand.u32 %s140, 1
        %s2619 = smul.addr %s2618, 2
        %s2620 = scalar_lea.vmem [#allocation4], %s2619
        // Predicated region
        $region33: #{tpu_custom_call.1} parent=31 // pred_check
          %p2621 = pneg %p122
        $region34: #{tpu_custom_call.1} parent=31 // pred_check_branch
          %2623 = sbr.rel (%p2621) target = $region36
        $region35: #{tpu_custom_call.1} parent=31 // pred_region
          %s2624 = smul.u32 16, %s27
          %2626 = vsyncadd %s2612, 0
          %s2627 = smul.addr %s2624, 2
          %s2628 = smul.addr %s26, 32
          %s2629 = sadd.s32 %s2627, %s2628
          %s2630 = smul.addr %s2629, 4
          %s2631 = scalar_lea.hbm %s3, %s2630
          %s2632 = sshll.u32 %s2615, 4
          %s2633 = int_to_ptr.vmem [resolvable:$true] %s2632
          %s2634 = sshll.u32 %s2631, 4
          %s2635 = int_to_ptr.hbm [resolvable:$true] %s2634
          %2640 = dma.vmem_to_hbm [thread:$0]  %s2633, 2048, %s2635, %s2612, 64, 64, 4
        $region36: #{tpu_custom_call.1} parent=31 // pred_fallthru
          _
        // Predicated region
        $region37: #{tpu_custom_call.1} parent=31 // pred_check
          %p2641 = pneg %p150
        $region38: #{tpu_custom_call.1} parent=31 // pred_check_branch
          %2643 = sbr.rel (%p2641) target = $region40
        $region39: #{tpu_custom_call.1} parent=31 // pred_region
          %2645 = vsyncadd %s2617, 0
          %s2646 = sadd.s32 %s27, %s26
          %s2647 = smul.addr %s2646, 2
          %s2648 = scalar_lea.hbm %s4, %s2647
          %s2650 = sshll.u32 %s2620, 4
          %s2651 = int_to_ptr.vmem [resolvable:$true] %s2650
          %s2652 = sshll.u32 %s2648, 4
          %s2653 = int_to_ptr.hbm [resolvable:$true] %s2652
          %2655 = dma.vmem_to_hbm [thread:$0]  %s2651, 32, %s2653, %s2617
        $region40: #{tpu_custom_call.1} parent=31 // pred_fallthru
          _
      $region32: #{tpu_custom_call.1} parent=5 // pred_fallthru
        _
      %p2656 = scmp.le.s32.totalorder 2, %s17
      // Predicated region
      $region41: #{tpu_custom_call.1} parent=5 // pred_check
        %p2657 = pneg %p2656
      $region42: #{tpu_custom_call.1} parent=5 // pred_check_branch
        %2659 = sbr.rel (%p2657) target = $region44
      $region43: #{tpu_custom_call.1} parent=5 // pred_region
        %s2660 = ssub.s32 %s17, 2
        // Predicated region
        $region45: #{tpu_custom_call.1} parent=43 // pred_check
          %p2661 = pneg %p128
        $region46: #{tpu_custom_call.1} parent=43 // pred_check_branch
          %2663 = sbr.rel (%p2661) target = $region48
        $region47: #{tpu_custom_call.1} parent=43 // pred_region
          %s2664 = sand.u32 %s113, 1
          %s2665 = scalar_lea.sflag [#allocation3], %s2664
          %s2666 = sand.u32 %s113, 1
          %s2667 = smul.addr %s2666, 128
          %s2668 = scalar_lea.vmem [#allocation2], %s2667
          %2670 = dma.done %s2665, 2048
        $region48: #{tpu_custom_call.1} parent=43 // pred_fallthru
          _
        // Predicated region
        $region49: #{tpu_custom_call.1} parent=43 // pred_check
          %p2671 = pneg %p156
        $region50: #{tpu_custom_call.1} parent=43 // pred_check_branch
          %2673 = sbr.rel (%p2671) target = $region52
        $region51: #{tpu_custom_call.1} parent=43 // pred_region
          %s2674 = sand.u32 %s141, 1
          %s2675 = scalar_lea.sflag [#allocation5], %s2674
          %s2676 = sand.u32 %s141, 1
          %s2677 = smul.addr %s2676, 2
          %s2678 = scalar_lea.vmem [#allocation4], %s2677
          %2680 = dma.done %s2675, 32
        $region52: #{tpu_custom_call.1} parent=43 // pred_fallthru
          _
      $region44: #{tpu_custom_call.1} parent=5 // pred_fallthru
        _
    $region6: #{tpu_custom_call.1} parent=1 // loop_footer
      %s21 = sadd.s32 1, %s17
    $region7: #{tpu_custom_call.1} parent=1 // loop_footer_branch
      %16 = sbr.rel target = $region3
    $region8: #{tpu_custom_call.1} parent=1 // loop_exit
      _
    %2681 = vsyncpa [#allocation3], 1
    %s2682 = scalar_lea.sflag [#allocation3], 1
    %2683 = vsyncpa %s2682, 1
    %2684 = vsyncpa [#allocation5], 1
    %s2685 = scalar_lea.sflag [#allocation5], 1
    %2686 = vsyncpa %s2685, 1

</llo_original>
